<compile_context>
chip_gen: v7x
topology: tpu7x:2x2x1
jax: 0.10.0
libtpu: 0.0.40
codegen_flags: <defaults>
</compile_context>

<pallas_src>
import functools
import math

import jax
import jax.numpy as jnp
from jax.experimental import pallas as pl
from jax.experimental.pallas import tpu as pltpu


# ----------------------------------------------------------------------------
# Kernel: full multi-head attention forward, one invocation
# ----------------------------------------------------------------------------
def attention_kernel(x_ref, wqkv_ref, bqkv_ref, wo_ref, bo_ref, o_ref,
                     *, batch, seq, num_heads, d_k):
    D = num_heads * d_k

    # Hoisted single reads of every operand (no re-broadcast per use site).
    x = x_ref[...]            # (B*S, 3D)  rows of concat(query, key, value)
    w_qkv = wqkv_ref[...]     # (3D, 3D)   block-diag(Wq, Wk, Wv)
    b_qkv = bqkv_ref[...]     # (1, 3D)    concat(bq, bk, bv)
    w_o = wo_ref[...]         # (D, D)
    b_o = bo_ref[...]         # (1, D)

    # Fused Q/K/V projection: one MXU push instead of three.
    qkv = jnp.dot(x, w_qkv, preferred_element_type=jnp.float32) + b_qkv  # (B*S, 3D)

    scale = 1.0 / math.sqrt(d_k)

    ctx_rows = []
    for b in range(batch):                    # static unroll (B is tiny)
        r0 = b * seq
        head_ctx = []
        for h in range(num_heads):            # static unroll, static lane slices
            cq = h * d_k                      # -> no reshape/transpose relayouts
            ck = D + h * d_k
            cv = 2 * D + h * d_k
            qh = qkv[r0:r0 + seq, cq:cq + d_k]   # (S, d_k)
            kh = qkv[r0:r0 + seq, ck:ck + d_k]   # (S, d_k)
            vh = qkv[r0:r0 + seq, cv:cv + d_k]   # (S, d_k)

            # scores = q @ k^T / sqrt(d_k)  (contraction on d_k, no transpose op)
            s = jnp.einsum('qd,kd->qk', qh, kh,
                           preferred_element_type=jnp.float32) * scale
            s = s - jnp.max(s, axis=-1, keepdims=True)
            e = jnp.exp(s)
            inv = pl.reciprocal(jnp.sum(e, axis=-1, keepdims=True), approx=True)
            p = e * inv                                          # softmax
            head_ctx.append(jnp.dot(p, vh,
                                    preferred_element_type=jnp.float32))
        ctx_rows.append(jnp.concatenate(head_ctx, axis=-1))      # (S, D)
    ctx = jnp.concatenate(ctx_rows, axis=0)                      # (B*S, D)

    out = jnp.dot(ctx, w_o, preferred_element_type=jnp.float32) + b_o
    o_ref[...] = out.astype(o_ref.dtype)


# ----------------------------------------------------------------------------
# Wrapper
# ----------------------------------------------------------------------------
def attention_fwd(query, key, value, params, num_heads):
    wq, bq, wk, bk, wv, bv, wo, bo = params
    B, S, D = query.shape
    d_k = D // num_heads

    # Fuse the three projections: concat(q|k|v) on the feature axis and a
    # block-diagonal weight  ==>  concat(q@Wq | k@Wk | v@Wv).
    x_cat = jnp.concatenate([query, key, value], axis=-1).reshape(B * S, 3 * D)
    w_qkv = jnp.zeros((3 * D, 3 * D), dtype=wq.dtype)
    w_qkv = w_qkv.at[0:D, 0:D].set(wq)
    w_qkv = w_qkv.at[D:2 * D, D:2 * D].set(wk)
    w_qkv = w_qkv.at[2 * D:3 * D, 2 * D:3 * D].set(wv)
    b_qkv = jnp.concatenate([bq, bk, bv]).reshape(1, 3 * D)
    bo2 = bo.reshape(1, D)

    kern = functools.partial(attention_kernel, batch=B, seq=S,
                             num_heads=num_heads, d_k=d_k)

    out2d = pl.pallas_call(
        kern,
        out_shape=jax.ShapeDtypeStruct((B * S, D), jnp.float32),
        grid=(1,),
        in_specs=[
            pl.BlockSpec((B * S, 3 * D), lambda i: (0, 0)),
            pl.BlockSpec((3 * D, 3 * D), lambda i: (0, 0)),
            pl.BlockSpec((1, 3 * D), lambda i: (0, 0)),
            pl.BlockSpec((D, D), lambda i: (0, 0)),
            pl.BlockSpec((1, D), lambda i: (0, 0)),
        ],
        out_specs=pl.BlockSpec((B * S, D), lambda i: (0, 0)),
        compiler_params=pltpu.CompilerParams(
            dimension_semantics=("arbitrary",)),
    )(x_cat, w_qkv, b_qkv, wo, bo2)
    return out2d.reshape(B, S, D)


# ----------------------------------------------------------------------------
# Parameter init (nn.Linear-style) + pure-JAX reference
# ----------------------------------------------------------------------------
def linear_init(key, d_in, d_out):
    kw, kb = jax.random.split(key)
    bound = 1.0 / math.sqrt(d_in)
    w = jax.random.uniform(kw, (d_in, d_out), jnp.float32, -bound, bound)
    b = jax.random.uniform(kb, (d_out,), jnp.float32, -bound, bound)
    return w, b


def init_attention_params(key, d_model):
    ks = jax.random.split(key, 4)
    wq, bq = linear_init(ks[0], d_model, d_model)
    wk, bk = linear_init(ks[1], d_model, d_model)
    wv, bv = linear_init(ks[2], d_model, d_model)
    wo, bo = linear_init(ks[3], d_model, d_model)
    return (wq, bq, wk, bk, wv, bv, wo, bo)


def attention_ref(query, key, value, params, num_heads):
    wq, bq, wk, bk, wv, bv, wo, bo = params
    B, S, D = query.shape
    d_k = D // num_heads
    q = (query @ wq + bq).reshape(B, S, num_heads, d_k).transpose(0, 2, 1, 3)
    k = (key @ wk + bk).reshape(B, S, num_heads, d_k).transpose(0, 2, 1, 3)
    v = (value @ wv + bv).reshape(B, S, num_heads, d_k).transpose(0, 2, 1, 3)
    s = jnp.einsum('bhqd,bhkd->bhqk', q, k) / math.sqrt(d_k)
    p = jax.nn.softmax(s, axis=-1)
    ctx = jnp.einsum('bhqk,bhkd->bhqd', p, v)
    ctx = ctx.transpose(0, 2, 1, 3).reshape(B, S, D)
    return ctx @ wo + bo


# ----------------------------------------------------------------------------
if __name__ == "__main__":
    d_model, num_heads = 32, 4
    B, S = 2, 8

    root = jax.random.PRNGKey(0)
    kq, kk, kv, kp = jax.random.split(root, 4)
    query = jax.random.normal(kq, (B, S, d_model), jnp.float32)
    key_in = jax.random.normal(kk, (B, S, d_model), jnp.float32)
    value = jax.random.normal(kv, (B, S, d_model), jnp.float32)
    params = init_attention_params(kp, d_model)

    fwd = jax.jit(functools.partial(attention_fwd, num_heads=num_heads))
    out = fwd(query, key_in, value, params)
    jax.block_until_ready(out)
    assert out.shape == (B, S, d_model), out.shape

    with jax.default_matmul_precision("highest"):
        ref = attention_ref(query, key_in, value, params, num_heads)
    err = float(jnp.max(jnp.abs(out - ref)))
    assert err < 1e-2, f"max abs error {err}"

    print("KERNEL_OK")
</pallas_src>

<mosaic_0001>
module attributes {stable_mosaic.version = 11 : i64} {
  func.func @attention_kernel(%arg0: i32, %arg1: memref<16x96xf32, #tpu.memory_space<vmem>>, %arg2: memref<96x96xf32, #tpu.memory_space<vmem>>, %arg3: memref<1x96xf32, #tpu.memory_space<vmem>>, %arg4: memref<32x32xf32, #tpu.memory_space<vmem>>, %arg5: memref<1x32xf32, #tpu.memory_space<vmem>>, %arg6: memref<16x32xf32, #tpu.memory_space<vmem>>) attributes {dimension_semantics = [#tpu.dimension_semantics<arbitrary>], iteration_bounds = array<i64: 1>, scalar_prefetch = 0 : i64, scratch_operands = 0 : i64, tpu.core_type = #tpu.core_type<tc>, window_params = [{pipeline_mode = #tpu.pipeline_mode<synchronous>, transform_indices = @transform_0, window_bounds = array<i64: 16, 96>}, {pipeline_mode = #tpu.pipeline_mode<synchronous>, transform_indices = @transform_1, window_bounds = array<i64: 96, 96>}, {pipeline_mode = #tpu.pipeline_mode<synchronous>, transform_indices = @transform_2, window_bounds = array<i64: 1, 96>}, {pipeline_mode = #tpu.pipeline_mode<synchronous>, transform_indices = @transform_3, window_bounds = array<i64: 32, 32>}, {pipeline_mode = #tpu.pipeline_mode<synchronous>, transform_indices = @transform_4, window_bounds = array<i64: 1, 32>}, {pipeline_mode = #tpu.pipeline_mode<synchronous>, transform_indices = @transform_5, window_bounds = array<i64: 16, 32>}]} {
    %c0 = arith.constant 0 : index
    %c0_0 = arith.constant 0 : index
    %0 = vector.load %arg1[%c0, %c0_0] : memref<16x96xf32, #tpu.memory_space<vmem>>, vector<16x96xf32>
    %c0_1 = arith.constant 0 : index
    %c0_2 = arith.constant 0 : index
    %1 = vector.load %arg2[%c0_1, %c0_2] : memref<96x96xf32, #tpu.memory_space<vmem>>, vector<96x96xf32>
    %c0_3 = arith.constant 0 : index
    %c0_4 = arith.constant 0 : index
    %2 = vector.load %arg3[%c0_3, %c0_4] : memref<1x96xf32, #tpu.memory_space<vmem>>, vector<1x96xf32>
    %c0_5 = arith.constant 0 : index
    %c0_6 = arith.constant 0 : index
    %3 = vector.load %arg4[%c0_5, %c0_6] : memref<32x32xf32, #tpu.memory_space<vmem>>, vector<32x32xf32>
    %c0_7 = arith.constant 0 : index
    %c0_8 = arith.constant 0 : index
    %4 = vector.load %arg5[%c0_7, %c0_8] : memref<1x32xf32, #tpu.memory_space<vmem>>, vector<1x32xf32>
    %cst = arith.constant dense<0.000000e+00> : vector<16x96xf32>
    %5 = tpu.matmul %0, %1, %cst {dimension_numbers = #tpu.dot_dimension_numbers<[1], [0], [0], [1], [0, 0, 1, 1], [], []>} : vector<16x96xf32>, vector<96x96xf32>, vector<16x96xf32> -> vector<16x96xf32>
    %6 = vector.broadcast %2 : vector<1x96xf32> to vector<16x96xf32>
    %7 = arith.addf %5, %6 : vector<16x96xf32>
    %8 = vector.extract_strided_slice %7 {offsets = [0, 0], sizes = [8, 8], strides = [1, 1]} : vector<16x96xf32> to vector<8x8xf32>
    %9 = vector.extract_strided_slice %7 {offsets = [0, 32], sizes = [8, 8], strides = [1, 1]} : vector<16x96xf32> to vector<8x8xf32>
    %10 = vector.extract_strided_slice %7 {offsets = [0, 64], sizes = [8, 8], strides = [1, 1]} : vector<16x96xf32> to vector<8x8xf32>
    "tpu.trace_start"() <{level = 10 : i32, message = "qd,kd->qk"}> : () -> ()
    %cst_9 = arith.constant dense<0.000000e+00> : vector<8x8xf32>
    %11 = tpu.matmul %8, %9, %cst_9 {dimension_numbers = #tpu.dot_dimension_numbers<[1], [1], [0], [0], [0, 0, 1, 0], [], []>} : vector<8x8xf32>, vector<8x8xf32>, vector<8x8xf32> -> vector<8x8xf32>
    "tpu.trace_stop"() : () -> ()
    %cst_10 = arith.constant 0.353553385 : f32
    %12 = vector.broadcast %cst_10 : f32 to vector<8x8xf32>
    %13 = arith.mulf %11, %12 : vector<8x8xf32>
    %cst_11 = arith.constant dense<0xFF800000> : vector<8xf32>
    %14 = vector.multi_reduction <maximumf>, %13, %cst_11 [1] : vector<8x8xf32> to vector<8xf32>
    %15 = vector.shape_cast %14 : vector<8xf32> to vector<8x1xf32>
    %16 = vector.broadcast %15 : vector<8x1xf32> to vector<8x8xf32>
    %17 = arith.subf %13, %16 : vector<8x8xf32>
    %18 = math.exp %17 : vector<8x8xf32>
    %cst_12 = arith.constant dense<0.000000e+00> : vector<8xf32>
    %19 = vector.multi_reduction <add>, %18, %cst_12 [1] : vector<8x8xf32> to vector<8xf32>
    %20 = vector.shape_cast %19 : vector<8xf32> to vector<8x1xf32>
    %21 = tpu.reciprocal %20 {approx = true} : vector<8x1xf32> -> vector<8x1xf32>
    %22 = vector.broadcast %21 : vector<8x1xf32> to vector<8x8xf32>
    %23 = arith.mulf %18, %22 : vector<8x8xf32>
    %cst_13 = arith.constant dense<0.000000e+00> : vector<8x8xf32>
    %24 = tpu.matmul %23, %10, %cst_13 {dimension_numbers = #tpu.dot_dimension_numbers<[1], [0], [0], [1], [0, 0, 1, 1], [], []>} : vector<8x8xf32>, vector<8x8xf32>, vector<8x8xf32> -> vector<8x8xf32>
    %25 = vector.extract_strided_slice %7 {offsets = [0, 8], sizes = [8, 8], strides = [1, 1]} : vector<16x96xf32> to vector<8x8xf32>
    %26 = vector.extract_strided_slice %7 {offsets = [0, 40], sizes = [8, 8], strides = [1, 1]} : vector<16x96xf32> to vector<8x8xf32>
    %27 = vector.extract_strided_slice %7 {offsets = [0, 72], sizes = [8, 8], strides = [1, 1]} : vector<16x96xf32> to vector<8x8xf32>
    "tpu.trace_start"() <{level = 10 : i32, message = "qd,kd->qk"}> : () -> ()
    %cst_14 = arith.constant dense<0.000000e+00> : vector<8x8xf32>
    %28 = tpu.matmul %25, %26, %cst_14 {dimension_numbers = #tpu.dot_dimension_numbers<[1], [1], [0], [0], [0, 0, 1, 0], [], []>} : vector<8x8xf32>, vector<8x8xf32>, vector<8x8xf32> -> vector<8x8xf32>
    "tpu.trace_stop"() : () -> ()
    %cst_15 = arith.constant 0.353553385 : f32
    %29 = vector.broadcast %cst_15 : f32 to vector<8x8xf32>
    %30 = arith.mulf %28, %29 : vector<8x8xf32>
    %cst_16 = arith.constant dense<0xFF800000> : vector<8xf32>
    %31 = vector.multi_reduction <maximumf>, %30, %cst_16 [1] : vector<8x8xf32> to vector<8xf32>
    %32 = vector.shape_cast %31 : vector<8xf32> to vector<8x1xf32>
    %33 = vector.broadcast %32 : vector<8x1xf32> to vector<8x8xf32>
    %34 = arith.subf %30, %33 : vector<8x8xf32>
    %35 = math.exp %34 : vector<8x8xf32>
    %cst_17 = arith.constant dense<0.000000e+00> : vector<8xf32>
    %36 = vector.multi_reduction <add>, %35, %cst_17 [1] : vector<8x8xf32> to vector<8xf32>
    %37 = vector.shape_cast %36 : vector<8xf32> to vector<8x1xf32>
    %38 = tpu.reciprocal %37 {approx = true} : vector<8x1xf32> -> vector<8x1xf32>
    %39 = vector.broadcast %38 : vector<8x1xf32> to vector<8x8xf32>
    %40 = arith.mulf %35, %39 : vector<8x8xf32>
    %cst_18 = arith.constant dense<0.000000e+00> : vector<8x8xf32>
    %41 = tpu.matmul %40, %27, %cst_18 {dimension_numbers = #tpu.dot_dimension_numbers<[1], [0], [0], [1], [0, 0, 1, 1], [], []>} : vector<8x8xf32>, vector<8x8xf32>, vector<8x8xf32> -> vector<8x8xf32>
    %42 = vector.extract_strided_slice %7 {offsets = [0, 16], sizes = [8, 8], strides = [1, 1]} : vector<16x96xf32> to vector<8x8xf32>
    %43 = vector.extract_strided_slice %7 {offsets = [0, 48], sizes = [8, 8], strides = [1, 1]} : vector<16x96xf32> to vector<8x8xf32>
    %44 = vector.extract_strided_slice %7 {offsets = [0, 80], sizes = [8, 8], strides = [1, 1]} : vector<16x96xf32> to vector<8x8xf32>
    "tpu.trace_start"() <{level = 10 : i32, message = "qd,kd->qk"}> : () -> ()
    %cst_19 = arith.constant dense<0.000000e+00> : vector<8x8xf32>
    %45 = tpu.matmul %42, %43, %cst_19 {dimension_numbers = #tpu.dot_dimension_numbers<[1], [1], [0], [0], [0, 0, 1, 0], [], []>} : vector<8x8xf32>, vector<8x8xf32>, vector<8x8xf32> -> vector<8x8xf32>
    "tpu.trace_stop"() : () -> ()
    %cst_20 = arith.constant 0.353553385 : f32
    %46 = vector.broadcast %cst_20 : f32 to vector<8x8xf32>
    %47 = arith.mulf %45, %46 : vector<8x8xf32>
    %cst_21 = arith.constant dense<0xFF800000> : vector<8xf32>
    %48 = vector.multi_reduction <maximumf>, %47, %cst_21 [1] : vector<8x8xf32> to vector<8xf32>
    %49 = vector.shape_cast %48 : vector<8xf32> to vector<8x1xf32>
    %50 = vector.broadcast %49 : vector<8x1xf32> to vector<8x8xf32>
    %51 = arith.subf %47, %50 : vector<8x8xf32>
    %52 = math.exp %51 : vector<8x8xf32>
    %cst_22 = arith.constant dense<0.000000e+00> : vector<8xf32>
    %53 = vector.multi_reduction <add>, %52, %cst_22 [1] : vector<8x8xf32> to vector<8xf32>
    %54 = vector.shape_cast %53 : vector<8xf32> to vector<8x1xf32>
    %55 = tpu.reciprocal %54 {approx = true} : vector<8x1xf32> -> vector<8x1xf32>
    %56 = vector.broadcast %55 : vector<8x1xf32> to vector<8x8xf32>
    %57 = arith.mulf %52, %56 : vector<8x8xf32>
    %cst_23 = arith.constant dense<0.000000e+00> : vector<8x8xf32>
    %58 = tpu.matmul %57, %44, %cst_23 {dimension_numbers = #tpu.dot_dimension_numbers<[1], [0], [0], [1], [0, 0, 1, 1], [], []>} : vector<8x8xf32>, vector<8x8xf32>, vector<8x8xf32> -> vector<8x8xf32>
    %59 = vector.extract_strided_slice %7 {offsets = [0, 24], sizes = [8, 8], strides = [1, 1]} : vector<16x96xf32> to vector<8x8xf32>
    %60 = vector.extract_strided_slice %7 {offsets = [0, 56], sizes = [8, 8], strides = [1, 1]} : vector<16x96xf32> to vector<8x8xf32>
    %61 = vector.extract_strided_slice %7 {offsets = [0, 88], sizes = [8, 8], strides = [1, 1]} : vector<16x96xf32> to vector<8x8xf32>
    "tpu.trace_start"() <{level = 10 : i32, message = "qd,kd->qk"}> : () -> ()
    %cst_24 = arith.constant dense<0.000000e+00> : vector<8x8xf32>
    %62 = tpu.matmul %59, %60, %cst_24 {dimension_numbers = #tpu.dot_dimension_numbers<[1], [1], [0], [0], [0, 0, 1, 0], [], []>} : vector<8x8xf32>, vector<8x8xf32>, vector<8x8xf32> -> vector<8x8xf32>
    "tpu.trace_stop"() : () -> ()
    %cst_25 = arith.constant 0.353553385 : f32
    %63 = vector.broadcast %cst_25 : f32 to vector<8x8xf32>
    %64 = arith.mulf %62, %63 : vector<8x8xf32>
    %cst_26 = arith.constant dense<0xFF800000> : vector<8xf32>
    %65 = vector.multi_reduction <maximumf>, %64, %cst_26 [1] : vector<8x8xf32> to vector<8xf32>
    %66 = vector.shape_cast %65 : vector<8xf32> to vector<8x1xf32>
    %67 = vector.broadcast %66 : vector<8x1xf32> to vector<8x8xf32>
    %68 = arith.subf %64, %67 : vector<8x8xf32>
    %69 = math.exp %68 : vector<8x8xf32>
    %cst_27 = arith.constant dense<0.000000e+00> : vector<8xf32>
    %70 = vector.multi_reduction <add>, %69, %cst_27 [1] : vector<8x8xf32> to vector<8xf32>
    %71 = vector.shape_cast %70 : vector<8xf32> to vector<8x1xf32>
    %72 = tpu.reciprocal %71 {approx = true} : vector<8x1xf32> -> vector<8x1xf32>
    %73 = vector.broadcast %72 : vector<8x1xf32> to vector<8x8xf32>
    %74 = arith.mulf %69, %73 : vector<8x8xf32>
    %cst_28 = arith.constant dense<0.000000e+00> : vector<8x8xf32>
    %75 = tpu.matmul %74, %61, %cst_28 {dimension_numbers = #tpu.dot_dimension_numbers<[1], [0], [0], [1], [0, 0, 1, 1], [], []>} : vector<8x8xf32>, vector<8x8xf32>, vector<8x8xf32> -> vector<8x8xf32>
    %76 = tpu.concatenate %24, %41, %58, %75 in 1 : vector<8x8xf32>, vector<8x8xf32>, vector<8x8xf32>, vector<8x8xf32> -> vector<8x32xf32>
    %77 = vector.extract_strided_slice %7 {offsets = [8, 0], sizes = [8, 8], strides = [1, 1]} : vector<16x96xf32> to vector<8x8xf32>
    %78 = vector.extract_strided_slice %7 {offsets = [8, 32], sizes = [8, 8], strides = [1, 1]} : vector<16x96xf32> to vector<8x8xf32>
    %79 = vector.extract_strided_slice %7 {offsets = [8, 64], sizes = [8, 8], strides = [1, 1]} : vector<16x96xf32> to vector<8x8xf32>
    "tpu.trace_start"() <{level = 10 : i32, message = "qd,kd->qk"}> : () -> ()
    %cst_29 = arith.constant dense<0.000000e+00> : vector<8x8xf32>
    %80 = tpu.matmul %77, %78, %cst_29 {dimension_numbers = #tpu.dot_dimension_numbers<[1], [1], [0], [0], [0, 0, 1, 0], [], []>} : vector<8x8xf32>, vector<8x8xf32>, vector<8x8xf32> -> vector<8x8xf32>
    "tpu.trace_stop"() : () -> ()
    %cst_30 = arith.constant 0.353553385 : f32
    %81 = vector.broadcast %cst_30 : f32 to vector<8x8xf32>
    %82 = arith.mulf %80, %81 : vector<8x8xf32>
    %cst_31 = arith.constant dense<0xFF800000> : vector<8xf32>
    %83 = vector.multi_reduction <maximumf>, %82, %cst_31 [1] : vector<8x8xf32> to vector<8xf32>
    %84 = vector.shape_cast %83 : vector<8xf32> to vector<8x1xf32>
    %85 = vector.broadcast %84 : vector<8x1xf32> to vector<8x8xf32>
    %86 = arith.subf %82, %85 : vector<8x8xf32>
    %87 = math.exp %86 : vector<8x8xf32>
    %cst_32 = arith.constant dense<0.000000e+00> : vector<8xf32>
    %88 = vector.multi_reduction <add>, %87, %cst_32 [1] : vector<8x8xf32> to vector<8xf32>
    %89 = vector.shape_cast %88 : vector<8xf32> to vector<8x1xf32>
    %90 = tpu.reciprocal %89 {approx = true} : vector<8x1xf32> -> vector<8x1xf32>
    %91 = vector.broadcast %90 : vector<8x1xf32> to vector<8x8xf32>
    %92 = arith.mulf %87, %91 : vector<8x8xf32>
    %cst_33 = arith.constant dense<0.000000e+00> : vector<8x8xf32>
    %93 = tpu.matmul %92, %79, %cst_33 {dimension_numbers = #tpu.dot_dimension_numbers<[1], [0], [0], [1], [0, 0, 1, 1], [], []>} : vector<8x8xf32>, vector<8x8xf32>, vector<8x8xf32> -> vector<8x8xf32>
    %94 = vector.extract_strided_slice %7 {offsets = [8, 8], sizes = [8, 8], strides = [1, 1]} : vector<16x96xf32> to vector<8x8xf32>
    %95 = vector.extract_strided_slice %7 {offsets = [8, 40], sizes = [8, 8], strides = [1, 1]} : vector<16x96xf32> to vector<8x8xf32>
    %96 = vector.extract_strided_slice %7 {offsets = [8, 72], sizes = [8, 8], strides = [1, 1]} : vector<16x96xf32> to vector<8x8xf32>
    "tpu.trace_start"() <{level = 10 : i32, message = "qd,kd->qk"}> : () -> ()
    %cst_34 = arith.constant dense<0.000000e+00> : vector<8x8xf32>
    %97 = tpu.matmul %94, %95, %cst_34 {dimension_numbers = #tpu.dot_dimension_numbers<[1], [1], [0], [0], [0, 0, 1, 0], [], []>} : vector<8x8xf32>, vector<8x8xf32>, vector<8x8xf32> -> vector<8x8xf32>
    "tpu.trace_stop"() : () -> ()
    %cst_35 = arith.constant 0.353553385 : f32
    %98 = vector.broadcast %cst_35 : f32 to vector<8x8xf32>
    %99 = arith.mulf %97, %98 : vector<8x8xf32>
    %cst_36 = arith.constant dense<0xFF800000> : vector<8xf32>
    %100 = vector.multi_reduction <maximumf>, %99, %cst_36 [1] : vector<8x8xf32> to vector<8xf32>
    %101 = vector.shape_cast %100 : vector<8xf32> to vector<8x1xf32>
    %102 = vector.broadcast %101 : vector<8x1xf32> to vector<8x8xf32>
    %103 = arith.subf %99, %102 : vector<8x8xf32>
    %104 = math.exp %103 : vector<8x8xf32>
    %cst_37 = arith.constant dense<0.000000e+00> : vector<8xf32>
    %105 = vector.multi_reduction <add>, %104, %cst_37 [1] : vector<8x8xf32> to vector<8xf32>
    %106 = vector.shape_cast %105 : vector<8xf32> to vector<8x1xf32>
    %107 = tpu.reciprocal %106 {approx = true} : vector<8x1xf32> -> vector<8x1xf32>
    %108 = vector.broadcast %107 : vector<8x1xf32> to vector<8x8xf32>
    %109 = arith.mulf %104, %108 : vector<8x8xf32>
    %cst_38 = arith.constant dense<0.000000e+00> : vector<8x8xf32>
    %110 = tpu.matmul %109, %96, %cst_38 {dimension_numbers = #tpu.dot_dimension_numbers<[1], [0], [0], [1], [0, 0, 1, 1], [], []>} : vector<8x8xf32>, vector<8x8xf32>, vector<8x8xf32> -> vector<8x8xf32>
    %111 = vector.extract_strided_slice %7 {offsets = [8, 16], sizes = [8, 8], strides = [1, 1]} : vector<16x96xf32> to vector<8x8xf32>
    %112 = vector.extract_strided_slice %7 {offsets = [8, 48], sizes = [8, 8], strides = [1, 1]} : vector<16x96xf32> to vector<8x8xf32>
    %113 = vector.extract_strided_slice %7 {offsets = [8, 80], sizes = [8, 8], strides = [1, 1]} : vector<16x96xf32> to vector<8x8xf32>
    "tpu.trace_start"() <{level = 10 : i32, message = "qd,kd->qk"}> : () -> ()
    %cst_39 = arith.constant dense<0.000000e+00> : vector<8x8xf32>
    %114 = tpu.matmul %111, %112, %cst_39 {dimension_numbers = #tpu.dot_dimension_numbers<[1], [1], [0], [0], [0, 0, 1, 0], [], []>} : vector<8x8xf32>, vector<8x8xf32>, vector<8x8xf32> -> vector<8x8xf32>
    "tpu.trace_stop"() : () -> ()
    %cst_40 = arith.constant 0.353553385 : f32
    %115 = vector.broadcast %cst_40 : f32 to vector<8x8xf32>
    %116 = arith.mulf %114, %115 : vector<8x8xf32>
    %cst_41 = arith.constant dense<0xFF800000> : vector<8xf32>
    %117 = vector.multi_reduction <maximumf>, %116, %cst_41 [1] : vector<8x8xf32> to vector<8xf32>
    %118 = vector.shape_cast %117 : vector<8xf32> to vector<8x1xf32>
    %119 = vector.broadcast %118 : vector<8x1xf32> to vector<8x8xf32>
    %120 = arith.subf %116, %119 : vector<8x8xf32>
    %121 = math.exp %120 : vector<8x8xf32>
    %cst_42 = arith.constant dense<0.000000e+00> : vector<8xf32>
    %122 = vector.multi_reduction <add>, %121, %cst_42 [1] : vector<8x8xf32> to vector<8xf32>
    %123 = vector.shape_cast %122 : vector<8xf32> to vector<8x1xf32>
    %124 = tpu.reciprocal %123 {approx = true} : vector<8x1xf32> -> vector<8x1xf32>
    %125 = vector.broadcast %124 : vector<8x1xf32> to vector<8x8xf32>
    %126 = arith.mulf %121, %125 : vector<8x8xf32>
    %cst_43 = arith.constant dense<0.000000e+00> : vector<8x8xf32>
    %127 = tpu.matmul %126, %113, %cst_43 {dimension_numbers = #tpu.dot_dimension_numbers<[1], [0], [0], [1], [0, 0, 1, 1], [], []>} : vector<8x8xf32>, vector<8x8xf32>, vector<8x8xf32> -> vector<8x8xf32>
    %128 = vector.extract_strided_slice %7 {offsets = [8, 24], sizes = [8, 8], strides = [1, 1]} : vector<16x96xf32> to vector<8x8xf32>
    %129 = vector.extract_strided_slice %7 {offsets = [8, 56], sizes = [8, 8], strides = [1, 1]} : vector<16x96xf32> to vector<8x8xf32>
    %130 = vector.extract_strided_slice %7 {offsets = [8, 88], sizes = [8, 8], strides = [1, 1]} : vector<16x96xf32> to vector<8x8xf32>
    "tpu.trace_start"() <{level = 10 : i32, message = "qd,kd->qk"}> : () -> ()
    %cst_44 = arith.constant dense<0.000000e+00> : vector<8x8xf32>
    %131 = tpu.matmul %128, %129, %cst_44 {dimension_numbers = #tpu.dot_dimension_numbers<[1], [1], [0], [0], [0, 0, 1, 0], [], []>} : vector<8x8xf32>, vector<8x8xf32>, vector<8x8xf32> -> vector<8x8xf32>
    "tpu.trace_stop"() : () -> ()
    %cst_45 = arith.constant 0.353553385 : f32
    %132 = vector.broadcast %cst_45 : f32 to vector<8x8xf32>
    %133 = arith.mulf %131, %132 : vector<8x8xf32>
    %cst_46 = arith.constant dense<0xFF800000> : vector<8xf32>
    %134 = vector.multi_reduction <maximumf>, %133, %cst_46 [1] : vector<8x8xf32> to vector<8xf32>
    %135 = vector.shape_cast %134 : vector<8xf32> to vector<8x1xf32>
    %136 = vector.broadcast %135 : vector<8x1xf32> to vector<8x8xf32>
    %137 = arith.subf %133, %136 : vector<8x8xf32>
    %138 = math.exp %137 : vector<8x8xf32>
    %cst_47 = arith.constant dense<0.000000e+00> : vector<8xf32>
    %139 = vector.multi_reduction <add>, %138, %cst_47 [1] : vector<8x8xf32> to vector<8xf32>
    %140 = vector.shape_cast %139 : vector<8xf32> to vector<8x1xf32>
    %141 = tpu.reciprocal %140 {approx = true} : vector<8x1xf32> -> vector<8x1xf32>
    %142 = vector.broadcast %141 : vector<8x1xf32> to vector<8x8xf32>
    %143 = arith.mulf %138, %142 : vector<8x8xf32>
    %cst_48 = arith.constant dense<0.000000e+00> : vector<8x8xf32>
    %144 = tpu.matmul %143, %130, %cst_48 {dimension_numbers = #tpu.dot_dimension_numbers<[1], [0], [0], [1], [0, 0, 1, 1], [], []>} : vector<8x8xf32>, vector<8x8xf32>, vector<8x8xf32> -> vector<8x8xf32>
    %145 = tpu.concatenate %93, %110, %127, %144 in 1 : vector<8x8xf32>, vector<8x8xf32>, vector<8x8xf32>, vector<8x8xf32> -> vector<8x32xf32>
    %146 = tpu.concatenate %76, %145 in 0 : vector<8x32xf32>, vector<8x32xf32> -> vector<16x32xf32>
    %cst_49 = arith.constant dense<0.000000e+00> : vector<16x32xf32>
    %147 = tpu.matmul %146, %3, %cst_49 {dimension_numbers = #tpu.dot_dimension_numbers<[1], [0], [0], [1], [0, 0, 1, 1], [], []>} : vector<16x32xf32>, vector<32x32xf32>, vector<16x32xf32> -> vector<16x32xf32>
    %148 = vector.broadcast %4 : vector<1x32xf32> to vector<16x32xf32>
    %149 = arith.addf %147, %148 : vector<16x32xf32>
    %c0_50 = arith.constant 0 : index
    %c0_51 = arith.constant 0 : index
    %150 = vector.load %arg6[%c0_50, %c0_51] : memref<16x32xf32, #tpu.memory_space<vmem>>, vector<16x32xf32>
    tpu.vector_store %arg6[%c0_50, %c0_51], %149 {strides = array<i32>} : memref<16x32xf32, #tpu.memory_space<vmem>>, vector<16x32xf32>,
    return
  }
  func.func @transform_0(%arg0: i32) -> (i32, i32) {
    %c0_i32 = arith.constant 0 : i32
    %c0_i32_0 = arith.constant 0 : i32
    %c0_i32_1 = arith.constant 0 : i32
    return %c0_i32, %c0_i32_0 : i32, i32
  }
  func.func @transform_1(%arg0: i32) -> (i32, i32) {
    %c0_i32 = arith.constant 0 : i32
    %c0_i32_0 = arith.constant 0 : i32
    %c0_i32_1 = arith.constant 0 : i32
    return %c0_i32, %c0_i32_0 : i32, i32
  }
  func.func @transform_2(%arg0: i32) -> (i32, i32) {
    %c0_i32 = arith.constant 0 : i32
    %c0_i32_0 = arith.constant 0 : i32
    %c0_i32_1 = arith.constant 0 : i32
    return %c0_i32, %c0_i32_0 : i32, i32
  }
  func.func @transform_3(%arg0: i32) -> (i32, i32) {
    %c0_i32 = arith.constant 0 : i32
    %c0_i32_0 = arith.constant 0 : i32
    %c0_i32_1 = arith.constant 0 : i32
    return %c0_i32, %c0_i32_0 : i32, i32
  }
  func.func @transform_4(%arg0: i32) -> (i32, i32) {
    %c0_i32 = arith.constant 0 : i32
    %c0_i32_0 = arith.constant 0 : i32
    %c0_i32_1 = arith.constant 0 : i32
    return %c0_i32, %c0_i32_0 : i32, i32
  }
  func.func @transform_5(%arg0: i32) -> (i32, i32) {
    %c0_i32 = arith.constant 0 : i32
    %c0_i32_0 = arith.constant 0 : i32
    %c0_i32_1 = arith.constant 0 : i32
    return %c0_i32, %c0_i32_0 : i32, i32
  }
}

</mosaic_0001>

<llo_original>
// kernel: attention_fwd.1
$region0: #{attention_fwd.1}
  #allocation0 [shape = 'u32[]', space=smem, size = 0x4, offset = 0x4, fixed_abs, tag = 'smem constant byte address 0x4 - core index']
  #allocation1 [shape = 'u32[144,128]{1,0:T(1,128)}', space=vmem, size = 0x12000, scoped, tag = 'internal scratch']
  %s0 = inlined_call_operand.vmem [shape: f32[16,96], index: 0, kind: input, shape index: {}]
  %s1 = inlined_call_operand.vmem [shape: f32[96,96], index: 1, kind: input, shape index: {}]
  %s2 = inlined_call_operand.vmem [shape: f32[1,96], index: 2, kind: input, shape index: {}]
  %s3 = inlined_call_operand.vmem [shape: f32[32,32], index: 3, kind: input, shape index: {}]
  %s4 = inlined_call_operand.vmem [shape: f32[1,32], index: 4, kind: input, shape index: {}]
  %s5 = inlined_call_operand.hbm [shape: f32[16,32], index: 5, kind: output, shape index: {}]
  %s6 = sld [smem:[#allocation0]]
  $region30: #{attention_fwd.1} parent=0
    _
  %s8 = ssub.s32 1, %s6
  %s9 = scalar_select 0, %s8, %s6
  $region1: #{attention_fwd.1} parent=0
    #allocation2 [shape = 'u8[8192]{0}', space=vmem, size = 0x2000, scoped, tag = 'output window, operand 0, single buffered']
    #allocation3 [shape = 's32[1]{0}', space=sflag, size = 0x4, scoped, tag = 'scoped memory for attention_fwd.1']
    %10 = vsyncpa [#allocation3], 0
    // Predicated region
    $region2: #{attention_fwd.1} parent=1 // pred_check
      _
    $region3: #{attention_fwd.1} parent=1 // pred_check_branch
      %12 = sbr.rel (0) target = $region5
    $region4: #{attention_fwd.1} parent=1 // pred_region
      _
    $region5: #{attention_fwd.1} parent=1 // pred_fallthru
      _
    // Predicated region
    $region6: #{attention_fwd.1} parent=1 // pred_check
      _
    $region7: #{attention_fwd.1} parent=1 // pred_check_branch
      %14 = sbr.rel (0) target = $region9
    $region8: #{attention_fwd.1} parent=1 // pred_region
      _
    $region9: #{attention_fwd.1} parent=1 // pred_fallthru
      _
    // Predicated region
    $region10: #{attention_fwd.1} parent=1 // pred_check
      _
    $region11: #{attention_fwd.1} parent=1 // pred_check_branch
      %16 = sbr.rel (0) target = $region13
    $region12: #{attention_fwd.1} parent=1 // pred_region
      _
    $region13: #{attention_fwd.1} parent=1 // pred_fallthru
      _
    // Predicated region
    $region14: #{attention_fwd.1} parent=1 // pred_check
      _
    $region15: #{attention_fwd.1} parent=1 // pred_check_branch
      %18 = sbr.rel (0) target = $region17
    $region16: #{attention_fwd.1} parent=1 // pred_region
      _
    $region17: #{attention_fwd.1} parent=1 // pred_fallthru
      _
    // Predicated region
    $region18: #{attention_fwd.1} parent=1 // pred_check
      _
    $region19: #{attention_fwd.1} parent=1 // pred_check_branch
      %20 = sbr.rel (0) target = $region21
    $region20: #{attention_fwd.1} parent=1 // pred_region
      _
    $region21: #{attention_fwd.1} parent=1 // pred_fallthru
      _
    %v21 = vld [vmem:[%s0] sm:$0xff]
    %v22 = vld [vmem:[%s0 + $0x8] sm:$0xff]
    %v23 = vld [vmem:[%s1] sm:$0xff]
    %v24 = vld [vmem:[%s1 + $0x8] sm:$0xff]
    %v25 = vld [vmem:[%s1 + $0x10] sm:$0xff]
    %v26 = vld [vmem:[%s1 + $0x18] sm:$0xff]
    %v27 = vld [vmem:[%s1 + $0x20] sm:$0xff]
    %v28 = vld [vmem:[%s1 + $0x28] sm:$0xff]
    %v29 = vld [vmem:[%s1 + $0x30] sm:$0xff]
    %v30 = vld [vmem:[%s1 + $0x38] sm:$0xff]
    %v31 = vld [vmem:[%s1 + $0x40] sm:$0xff]
    %v32 = vld [vmem:[%s1 + $0x48] sm:$0xff]
    %v33 = vld [vmem:[%s1 + $0x50] sm:$0xff]
    %v34 = vld [vmem:[%s1 + $0x58] sm:$0xff]
    %v35 = vld [vmem:[%s2] sm:$0x1]
    %v36 = vld [vmem:[%s3] sm:$0xff]
    %v37 = vld [vmem:[%s3 + $0x8] sm:$0xff]
    %v38 = vld [vmem:[%s3 + $0x10] sm:$0xff]
    %v39 = vld [vmem:[%s3 + $0x18] sm:$0xff]
    %v40 = vld [vmem:[%s4] sm:$0x1]
    %v42 = vlaneseq
    %v43 = vshrl.u32 %v42, 7
    %v44 = vsub.s32 0, %v43
    %v45 = vrot.slane %v35, %v44
    %vm47 = vcmask 785408
    %v49 = vsel %vm47, %v21, 0
    %v52 = vsel %vm47, %v22, 0
    %54 = vmatprep.subr.mxu0 0.0
    %55 = vmatpush1.msra.mxu0 %v23
    %56 = vmatprep.subr.mxu0 0.0
    %57 = vmatpush1.msra.mxu0 %v24
    %58 = vmatprep.subr.mxu0 0.0
    %59 = vmatpush1.msra.mxu0 %v25
    %60 = vmatprep.subr.mxu0 0.0
    %61 = vmatpush1.msra.mxu0 %v26
    %62 = vmatprep.subr.mxu0 0.0
    %63 = vmatpush1.msra.mxu0 %v27
    %64 = vmatprep.subr.mxu0 0.0
    %65 = vmatpush1.msra.mxu0 %v28
    %66 = vmatprep.subr.mxu0 0.0
    %67 = vmatpush1.msra.mxu0 %v29
    %68 = vmatprep.subr.mxu0 0.0
    %69 = vmatpush1.msra.mxu0 %v30
    %70 = vmatprep.subr.mxu0 0.0
    %71 = vmatpush1.msra.mxu0 %v31
    %72 = vmatprep.subr.mxu0 0.0
    %73 = vmatpush1.msra.mxu0 %v32
    %74 = vmatprep.subr.mxu0 0.0
    %75 = vmatpush1.msra.mxu0 %v33
    %76 = vmatprep.subr.mxu0 0.0
    %77 = vmatpush1.msra.mxu0 %v34
    %78 = vmatprep.subr.mxu0 0.0
    %79 = vmatpush1.msra.mxu0 0.0
    %80 = vmatprep.subr.mxu0 0.0
    %81 = vmatpush1.msra.mxu0 0.0
    %82 = vmatprep.subr.mxu0 0.0
    %83 = vmatpush1.msra.mxu0 0.0
    %84 = vmatprep.subr.mxu0 0.0
    %85 = vmatpush1.msra.mxu0 0.0
    %86 = vmatprep.subr.mxu0 0.0
    %87 = vmatpush1.msra.mxu0 0.0
    %88 = vmatprep.subr.mxu0 0.0
    %89 = vmatpush1.msra.mxu0 0.0
    %90 = vmatprep.subr.mxu0 0.0
    %91 = vmatpush1.msra.mxu0 0.0
    %92 = vmatprep.subr.mxu0 0.0
    %93 = vmatpush1.msra.mxu0 0.0
    %94 = vmatprep.subr.mxu0 0.0
    %95 = vmatpush1.msra.mxu0 0.0
    %96 = vmatprep.subr.mxu0 0.0
    %97 = vmatpush1.msra.mxu0 0.0
    %98 = vmatprep.subr.mxu0 0.0
    %99 = vmatpush1.msra.mxu0 0.0
    %100 = vmatprep.subr.mxu0 0.0
    %101 = vmatpush1.msra.mxu0 0.0
    %102 = vmatprep.subr.mxu0 0.0
    %103 = vmatpush1.msra.mxu0 0.0
    %104 = vmatprep.subr.mxu0 0.0
    %105 = vmatpush1.msra.mxu0 0.0
    %106 = vmatprep.subr.mxu0 0.0
    %107 = vmatpush1.msra.mxu0 0.0
    %108 = vmatprep.subr.mxu0 0.0
    %109 = vmatpush1.msra.mxu0 0.0
    %110 = vmatprep.subr.mxu0 0.0
    %111 = vmatpush1.msra.mxu0 0.0
    %112 = vmatprep.subr.mxu0 0.0
    %113 = vmatpush1.msra.mxu0 0.0
    %114 = vmatprep.subr.mxu0 0.0
    %115 = vmatpush1.msra.mxu0 0.0
    %116 = vmatprep.subr.mxu0 0.0
    %117 = vmatpush1.msra.mxu0 0.0
    %118 = vmatprep.mubr.f32.mxu0 0.0
    %119 = vmatmul.mubr.f32.gmra.mrb[0].mxu0 %v49
    %v120 = vpop.f32.mrb[0].mxu0
    %v121 = vadd.f32 %v45, %v120
    %v122 = vpop.f32.mrb[0].mxu0
    %123 = vmatprep.mubr.f32.mxu0 0.0
    %124 = vmatmul.mubr.f32.gmra.mrb[0].mxu0 %v52
    %v125 = vpop.f32.mrb[0].mxu0
    %v126 = vadd.f32 %v45, %v125
    %v127 = vpop.f32.mrb[0].mxu0
    %128 = vdwg.mxu0
    %130 = vrot.lane.b32.xlu0 %v121, 96
    %v131 = vpop.permute.xlu0 %130
    %vm132 = vcmask 64512
    %v133 = vsel %vm132, %v121, 0
    %v135 = vsel %vm132, %v131, 0
    %137 = vmatprep.subr.mxu0 0.0
    %138 = vmatpush1.xpose.msra.mxu0 %v135
    %139 = vmatprep.subr.mxu0 0.0
    %140 = vmatpush1.xpose.msra.mxu0 0.0
    %141 = vmatprep.subr.mxu0 0.0
    %142 = vmatpush1.xpose.msra.mxu0 0.0
    %143 = vmatprep.subr.mxu0 0.0
    %144 = vmatpush1.xpose.msra.mxu0 0.0
    %145 = vmatprep.subr.mxu0 0.0
    %146 = vmatpush1.xpose.msra.mxu0 0.0
    %147 = vmatprep.subr.mxu0 0.0
    %148 = vmatpush1.xpose.msra.mxu0 0.0
    %149 = vmatprep.subr.mxu0 0.0
    %150 = vmatpush1.xpose.msra.mxu0 0.0
    %151 = vmatprep.subr.mxu0 0.0
    %152 = vmatpush1.xpose.msra.mxu0 0.0
    %153 = vmatprep.subr.mxu0 0.0
    %154 = vmatpush1.xpose.msra.mxu0 0.0
    %155 = vmatprep.subr.mxu0 0.0
    %156 = vmatpush1.xpose.msra.mxu0 0.0
    %157 = vmatprep.subr.mxu0 0.0
    %158 = vmatpush1.xpose.msra.mxu0 0.0
    %159 = vmatprep.subr.mxu0 0.0
    %160 = vmatpush1.xpose.msra.mxu0 0.0
    %161 = vmatprep.subr.mxu0 0.0
    %162 = vmatpush1.xpose.msra.mxu0 0.0
    %163 = vmatprep.subr.mxu0 0.0
    %164 = vmatpush1.xpose.msra.mxu0 0.0
    %165 = vmatprep.subr.mxu0 0.0
    %166 = vmatpush1.xpose.msra.mxu0 0.0
    %167 = vmatprep.subr.mxu0 0.0
    %168 = vmatpush1.xpose.msra.mxu0 0.0
    %169 = vmatprep.subr.mxu0 0.0
    %170 = vmatpush1.xpose.msra.mxu0 0.0
    %171 = vmatprep.subr.mxu0 0.0
    %172 = vmatpush1.xpose.msra.mxu0 0.0
    %173 = vmatprep.subr.mxu0 0.0
    %174 = vmatpush1.xpose.msra.mxu0 0.0
    %175 = vmatprep.subr.mxu0 0.0
    %176 = vmatpush1.xpose.msra.mxu0 0.0
    %177 = vmatprep.subr.mxu0 0.0
    %178 = vmatpush1.xpose.msra.mxu0 0.0
    %179 = vmatprep.subr.mxu0 0.0
    %180 = vmatpush1.xpose.msra.mxu0 0.0
    %181 = vmatprep.subr.mxu0 0.0
    %182 = vmatpush1.xpose.msra.mxu0 0.0
    %183 = vmatprep.subr.mxu0 0.0
    %184 = vmatpush1.xpose.msra.mxu0 0.0
    %185 = vmatprep.subr.mxu0 0.0
    %186 = vmatpush1.xpose.msra.mxu0 0.0
    %187 = vmatprep.subr.mxu0 0.0
    %188 = vmatpush1.xpose.msra.mxu0 0.0
    %189 = vmatprep.subr.mxu0 0.0
    %190 = vmatpush1.xpose.msra.mxu0 0.0
    %191 = vmatprep.subr.mxu0 0.0
    %192 = vmatpush1.xpose.msra.mxu0 0.0
    %193 = vmatprep.subr.mxu0 0.0
    %194 = vmatpush1.xpose.msra.mxu0 0.0
    %195 = vmatprep.subr.mxu0 0.0
    %196 = vmatpush1.xpose.msra.mxu0 0.0
    %197 = vmatprep.subr.mxu0 0.0
    %198 = vmatpush1.xpose.msra.mxu0 0.0
    %199 = vmatprep.subr.mxu0 0.0
    %200 = vmatpush1.xpose.msra.mxu0 0.0
    %201 = vmatprep.mubr.f32.mxu0 0.0
    %202 = vmatmul.mubr.f32.gmra.mrb[0].mxu0 %v133
    %v203 = vpop.f32.mrb[0].mxu0
    %v204 = vadd.f32 0.0, %v203
    %v205 = vpop.f32.mrb[0].mxu0
    %206 = vdwg.mxu0
    %v207 = vmul.f32 %v204, 0.35355338
    %v208 = vsel %vm132, %v207, -inf
    %209 = vmax.xlane.f32.xlu0 %v208
    %v210 = vpop.xlane.xlu0 %209
    %v211 = vsub.f32 %v207, %v210
    %v212 = vmul.f32 %v211, 1.442695
    %v213 = vpow.pop %v212
    %v214 = vsel %vm132, %v213, 0.0
    %215 = vadd.xlane.f32.xlu0 %v214
    %v216 = vpop.xlane.xlu0 %215
    %v217 = vrcp.pop %v216
    %v218 = vmul.f32 %v213, %v217
    %219 = vrot.lane.b32.xlu0 %v121, 64
    %v220 = vpop.permute.xlu0 %219
    %v223 = vsel %vm132, %v218, 0
    %225 = vmatprep.subr.mxu0 0.0
    %226 = vmatpush1.msra.mxu0 %v220
    %227 = vmatprep.subr.mxu0 0.0
    %228 = vmatpush1.msra.mxu0 0.0
    %229 = vmatprep.subr.mxu0 0.0
    %230 = vmatpush1.msra.mxu0 0.0
    %231 = vmatprep.subr.mxu0 0.0
    %232 = vmatpush1.msra.mxu0 0.0
    %233 = vmatprep.subr.mxu0 0.0
    %234 = vmatpush1.msra.mxu0 0.0
    %235 = vmatprep.subr.mxu0 0.0
    %236 = vmatpush1.msra.mxu0 0.0
    %237 = vmatprep.subr.mxu0 0.0
    %238 = vmatpush1.msra.mxu0 0.0
    %239 = vmatprep.subr.mxu0 0.0
    %240 = vmatpush1.msra.mxu0 0.0
    %241 = vmatprep.subr.mxu0 0.0
    %242 = vmatpush1.msra.mxu0 0.0
    %243 = vmatprep.subr.mxu0 0.0
    %244 = vmatpush1.msra.mxu0 0.0
    %245 = vmatprep.subr.mxu0 0.0
    %246 = vmatpush1.msra.mxu0 0.0
    %247 = vmatprep.subr.mxu0 0.0
    %248 = vmatpush1.msra.mxu0 0.0
    %249 = vmatprep.subr.mxu0 0.0
    %250 = vmatpush1.msra.mxu0 0.0
    %251 = vmatprep.subr.mxu0 0.0
    %252 = vmatpush1.msra.mxu0 0.0
    %253 = vmatprep.subr.mxu0 0.0
    %254 = vmatpush1.msra.mxu0 0.0
    %255 = vmatprep.subr.mxu0 0.0
    %256 = vmatpush1.msra.mxu0 0.0
    %257 = vmatprep.subr.mxu0 0.0
    %258 = vmatpush1.msra.mxu0 0.0
    %259 = vmatprep.subr.mxu0 0.0
    %260 = vmatpush1.msra.mxu0 0.0
    %261 = vmatprep.subr.mxu0 0.0
    %262 = vmatpush1.msra.mxu0 0.0
    %263 = vmatprep.subr.mxu0 0.0
    %264 = vmatpush1.msra.mxu0 0.0
    %265 = vmatprep.subr.mxu0 0.0
    %266 = vmatpush1.msra.mxu0 0.0
    %267 = vmatprep.subr.mxu0 0.0
    %268 = vmatpush1.msra.mxu0 0.0
    %269 = vmatprep.subr.mxu0 0.0
    %270 = vmatpush1.msra.mxu0 0.0
    %271 = vmatprep.subr.mxu0 0.0
    %272 = vmatpush1.msra.mxu0 0.0
    %273 = vmatprep.subr.mxu0 0.0
    %274 = vmatpush1.msra.mxu0 0.0
    %275 = vmatprep.subr.mxu0 0.0
    %276 = vmatpush1.msra.mxu0 0.0
    %277 = vmatprep.subr.mxu0 0.0
    %278 = vmatpush1.msra.mxu0 0.0
    %279 = vmatprep.subr.mxu0 0.0
    %280 = vmatpush1.msra.mxu0 0.0
    %281 = vmatprep.subr.mxu0 0.0
    %282 = vmatpush1.msra.mxu0 0.0
    %283 = vmatprep.subr.mxu0 0.0
    %284 = vmatpush1.msra.mxu0 0.0
    %285 = vmatprep.subr.mxu0 0.0
    %286 = vmatpush1.msra.mxu0 0.0
    %287 = vmatprep.subr.mxu0 0.0
    %288 = vmatpush1.msra.mxu0 0.0
    %289 = vmatprep.mubr.f32.mxu0 0.0
    %290 = vmatmul.mubr.f32.gmra.mrb[0].mxu0 %v223
    %v291 = vpop.f32.mrb[0].mxu0
    %v292 = vadd.f32 0.0, %v291
    %v293 = vpop.f32.mrb[0].mxu0
    %294 = vdwg.mxu0
    %295 = vrot.lane.b32.xlu0 %v121, 120
    %v296 = vpop.permute.xlu0 %295
    %297 = vrot.lane.b32.xlu0 %v121, 88
    %v298 = vpop.permute.xlu0 %297
    %v299 = vsel %vm132, %v296, 0
    %v301 = vsel %vm132, %v298, 0
    %303 = vmatprep.subr.mxu0 0.0
    %304 = vmatpush1.xpose.msra.mxu0 %v301
    %305 = vmatprep.subr.mxu0 0.0
    %306 = vmatpush1.xpose.msra.mxu0 0.0
    %307 = vmatprep.subr.mxu0 0.0
    %308 = vmatpush1.xpose.msra.mxu0 0.0
    %309 = vmatprep.subr.mxu0 0.0
    %310 = vmatpush1.xpose.msra.mxu0 0.0
    %311 = vmatprep.subr.mxu0 0.0
    %312 = vmatpush1.xpose.msra.mxu0 0.0
    %313 = vmatprep.subr.mxu0 0.0
    %314 = vmatpush1.xpose.msra.mxu0 0.0
    %315 = vmatprep.subr.mxu0 0.0
    %316 = vmatpush1.xpose.msra.mxu0 0.0
    %317 = vmatprep.subr.mxu0 0.0
    %318 = vmatpush1.xpose.msra.mxu0 0.0
    %319 = vmatprep.subr.mxu0 0.0
    %320 = vmatpush1.xpose.msra.mxu0 0.0
    %321 = vmatprep.subr.mxu0 0.0
    %322 = vmatpush1.xpose.msra.mxu0 0.0
    %323 = vmatprep.subr.mxu0 0.0
    %324 = vmatpush1.xpose.msra.mxu0 0.0
    %325 = vmatprep.subr.mxu0 0.0
    %326 = vmatpush1.xpose.msra.mxu0 0.0
    %327 = vmatprep.subr.mxu0 0.0
    %328 = vmatpush1.xpose.msra.mxu0 0.0
    %329 = vmatprep.subr.mxu0 0.0
    %330 = vmatpush1.xpose.msra.mxu0 0.0
    %331 = vmatprep.subr.mxu0 0.0
    %332 = vmatpush1.xpose.msra.mxu0 0.0
    %333 = vmatprep.subr.mxu0 0.0
    %334 = vmatpush1.xpose.msra.mxu0 0.0
    %335 = vmatprep.subr.mxu0 0.0
    %336 = vmatpush1.xpose.msra.mxu0 0.0
    %337 = vmatprep.subr.mxu0 0.0
    %338 = vmatpush1.xpose.msra.mxu0 0.0
    %339 = vmatprep.subr.mxu0 0.0
    %340 = vmatpush1.xpose.msra.mxu0 0.0
    %341 = vmatprep.subr.mxu0 0.0
    %342 = vmatpush1.xpose.msra.mxu0 0.0
    %343 = vmatprep.subr.mxu0 0.0
    %344 = vmatpush1.xpose.msra.mxu0 0.0
    %345 = vmatprep.subr.mxu0 0.0
    %346 = vmatpush1.xpose.msra.mxu0 0.0
    %347 = vmatprep.subr.mxu0 0.0
    %348 = vmatpush1.xpose.msra.mxu0 0.0
    %349 = vmatprep.subr.mxu0 0.0
    %350 = vmatpush1.xpose.msra.mxu0 0.0
    %351 = vmatprep.subr.mxu0 0.0
    %352 = vmatpush1.xpose.msra.mxu0 0.0
    %353 = vmatprep.subr.mxu0 0.0
    %354 = vmatpush1.xpose.msra.mxu0 0.0
    %355 = vmatprep.subr.mxu0 0.0
    %356 = vmatpush1.xpose.msra.mxu0 0.0
    %357 = vmatprep.subr.mxu0 0.0
    %358 = vmatpush1.xpose.msra.mxu0 0.0
    %359 = vmatprep.subr.mxu0 0.0
    %360 = vmatpush1.xpose.msra.mxu0 0.0
    %361 = vmatprep.subr.mxu0 0.0
    %362 = vmatpush1.xpose.msra.mxu0 0.0
    %363 = vmatprep.subr.mxu0 0.0
    %364 = vmatpush1.xpose.msra.mxu0 0.0
    %365 = vmatprep.subr.mxu0 0.0
    %366 = vmatpush1.xpose.msra.mxu0 0.0
    %367 = vmatprep.mubr.f32.mxu0 0.0
    %368 = vmatmul.mubr.f32.gmra.mrb[0].mxu0 %v299
    %v369 = vpop.f32.mrb[0].mxu0
    %v370 = vadd.f32 0.0, %v369
    %v371 = vpop.f32.mrb[0].mxu0
    %372 = vdwg.mxu0
    %v373 = vmul.f32 %v370, 0.35355338
    %v374 = vsel %vm132, %v373, -inf
    %375 = vmax.xlane.f32.xlu0 %v374
    %v376 = vpop.xlane.xlu0 %375
    %v377 = vsub.f32 %v373, %v376
    %v378 = vmul.f32 %v377, 1.442695
    %v379 = vpow.pop %v378
    %v380 = vsel %vm132, %v379, 0.0
    %381 = vadd.xlane.f32.xlu0 %v380
    %v382 = vpop.xlane.xlu0 %381
    %v383 = vrcp.pop %v382
    %v384 = vmul.f32 %v379, %v383
    %385 = vrot.lane.b32.xlu0 %v121, 56
    %v386 = vpop.permute.xlu0 %385
    %v389 = vsel %vm132, %v384, 0
    %391 = vmatprep.subr.mxu0 0.0
    %392 = vmatpush1.msra.mxu0 %v386
    %393 = vmatprep.subr.mxu0 0.0
    %394 = vmatpush1.msra.mxu0 0.0
    %395 = vmatprep.subr.mxu0 0.0
    %396 = vmatpush1.msra.mxu0 0.0
    %397 = vmatprep.subr.mxu0 0.0
    %398 = vmatpush1.msra.mxu0 0.0
    %399 = vmatprep.subr.mxu0 0.0
    %400 = vmatpush1.msra.mxu0 0.0
    %401 = vmatprep.subr.mxu0 0.0
    %402 = vmatpush1.msra.mxu0 0.0
    %403 = vmatprep.subr.mxu0 0.0
    %404 = vmatpush1.msra.mxu0 0.0
    %405 = vmatprep.subr.mxu0 0.0
    %406 = vmatpush1.msra.mxu0 0.0
    %407 = vmatprep.subr.mxu0 0.0
    %408 = vmatpush1.msra.mxu0 0.0
    %409 = vmatprep.subr.mxu0 0.0
    %410 = vmatpush1.msra.mxu0 0.0
    %411 = vmatprep.subr.mxu0 0.0
    %412 = vmatpush1.msra.mxu0 0.0
    %413 = vmatprep.subr.mxu0 0.0
    %414 = vmatpush1.msra.mxu0 0.0
    %415 = vmatprep.subr.mxu0 0.0
    %416 = vmatpush1.msra.mxu0 0.0
    %417 = vmatprep.subr.mxu0 0.0
    %418 = vmatpush1.msra.mxu0 0.0
    %419 = vmatprep.subr.mxu0 0.0
    %420 = vmatpush1.msra.mxu0 0.0
    %421 = vmatprep.subr.mxu0 0.0
    %422 = vmatpush1.msra.mxu0 0.0
    %423 = vmatprep.subr.mxu0 0.0
    %424 = vmatpush1.msra.mxu0 0.0
    %425 = vmatprep.subr.mxu0 0.0
    %426 = vmatpush1.msra.mxu0 0.0
    %427 = vmatprep.subr.mxu0 0.0
    %428 = vmatpush1.msra.mxu0 0.0
    %429 = vmatprep.subr.mxu0 0.0
    %430 = vmatpush1.msra.mxu0 0.0
    %431 = vmatprep.subr.mxu0 0.0
    %432 = vmatpush1.msra.mxu0 0.0
    %433 = vmatprep.subr.mxu0 0.0
    %434 = vmatpush1.msra.mxu0 0.0
    %435 = vmatprep.subr.mxu0 0.0
    %436 = vmatpush1.msra.mxu0 0.0
    %437 = vmatprep.subr.mxu0 0.0
    %438 = vmatpush1.msra.mxu0 0.0
    %439 = vmatprep.subr.mxu0 0.0
    %440 = vmatpush1.msra.mxu0 0.0
    %441 = vmatprep.subr.mxu0 0.0
    %442 = vmatpush1.msra.mxu0 0.0
    %443 = vmatprep.subr.mxu0 0.0
    %444 = vmatpush1.msra.mxu0 0.0
    %445 = vmatprep.subr.mxu0 0.0
    %446 = vmatpush1.msra.mxu0 0.0
    %447 = vmatprep.subr.mxu0 0.0
    %448 = vmatpush1.msra.mxu0 0.0
    %449 = vmatprep.subr.mxu0 0.0
    %450 = vmatpush1.msra.mxu0 0.0
    %451 = vmatprep.subr.mxu0 0.0
    %452 = vmatpush1.msra.mxu0 0.0
    %453 = vmatprep.subr.mxu0 0.0
    %454 = vmatpush1.msra.mxu0 0.0
    %455 = vmatprep.mubr.f32.mxu0 0.0
    %456 = vmatmul.mubr.f32.gmra.mrb[0].mxu0 %v389
    %v457 = vpop.f32.mrb[0].mxu0
    %v458 = vadd.f32 0.0, %v457
    %v459 = vpop.f32.mrb[0].mxu0
    %460 = vdwg.mxu0
    %461 = vrot.lane.b32.xlu0 %v121, 112
    %v462 = vpop.permute.xlu0 %461
    %463 = vrot.lane.b32.xlu0 %v121, 80
    %v464 = vpop.permute.xlu0 %463
    %v465 = vsel %vm132, %v462, 0
    %v467 = vsel %vm132, %v464, 0
    %469 = vmatprep.subr.mxu0 0.0
    %470 = vmatpush1.xpose.msra.mxu0 %v467
    %471 = vmatprep.subr.mxu0 0.0
    %472 = vmatpush1.xpose.msra.mxu0 0.0
    %473 = vmatprep.subr.mxu0 0.0
    %474 = vmatpush1.xpose.msra.mxu0 0.0
    %475 = vmatprep.subr.mxu0 0.0
    %476 = vmatpush1.xpose.msra.mxu0 0.0
    %477 = vmatprep.subr.mxu0 0.0
    %478 = vmatpush1.xpose.msra.mxu0 0.0
    %479 = vmatprep.subr.mxu0 0.0
    %480 = vmatpush1.xpose.msra.mxu0 0.0
    %481 = vmatprep.subr.mxu0 0.0
    %482 = vmatpush1.xpose.msra.mxu0 0.0
    %483 = vmatprep.subr.mxu0 0.0
    %484 = vmatpush1.xpose.msra.mxu0 0.0
    %485 = vmatprep.subr.mxu0 0.0
    %486 = vmatpush1.xpose.msra.mxu0 0.0
    %487 = vmatprep.subr.mxu0 0.0
    %488 = vmatpush1.xpose.msra.mxu0 0.0
    %489 = vmatprep.subr.mxu0 0.0
    %490 = vmatpush1.xpose.msra.mxu0 0.0
    %491 = vmatprep.subr.mxu0 0.0
    %492 = vmatpush1.xpose.msra.mxu0 0.0
    %493 = vmatprep.subr.mxu0 0.0
    %494 = vmatpush1.xpose.msra.mxu0 0.0
    %495 = vmatprep.subr.mxu0 0.0
    %496 = vmatpush1.xpose.msra.mxu0 0.0
    %497 = vmatprep.subr.mxu0 0.0
    %498 = vmatpush1.xpose.msra.mxu0 0.0
    %499 = vmatprep.subr.mxu0 0.0
    %500 = vmatpush1.xpose.msra.mxu0 0.0
    %501 = vmatprep.subr.mxu0 0.0
    %502 = vmatpush1.xpose.msra.mxu0 0.0
    %503 = vmatprep.subr.mxu0 0.0
    %504 = vmatpush1.xpose.msra.mxu0 0.0
    %505 = vmatprep.subr.mxu0 0.0
    %506 = vmatpush1.xpose.msra.mxu0 0.0
    %507 = vmatprep.subr.mxu0 0.0
    %508 = vmatpush1.xpose.msra.mxu0 0.0
    %509 = vmatprep.subr.mxu0 0.0
    %510 = vmatpush1.xpose.msra.mxu0 0.0
    %511 = vmatprep.subr.mxu0 0.0
    %512 = vmatpush1.xpose.msra.mxu0 0.0
    %513 = vmatprep.subr.mxu0 0.0
    %514 = vmatpush1.xpose.msra.mxu0 0.0
    %515 = vmatprep.subr.mxu0 0.0
    %516 = vmatpush1.xpose.msra.mxu0 0.0
    %517 = vmatprep.subr.mxu0 0.0
    %518 = vmatpush1.xpose.msra.mxu0 0.0
    %519 = vmatprep.subr.mxu0 0.0
    %520 = vmatpush1.xpose.msra.mxu0 0.0
    %521 = vmatprep.subr.mxu0 0.0
    %522 = vmatpush1.xpose.msra.mxu0 0.0
    %523 = vmatprep.subr.mxu0 0.0
    %524 = vmatpush1.xpose.msra.mxu0 0.0
    %525 = vmatprep.subr.mxu0 0.0
    %526 = vmatpush1.xpose.msra.mxu0 0.0
    %527 = vmatprep.subr.mxu0 0.0
    %528 = vmatpush1.xpose.msra.mxu0 0.0
    %529 = vmatprep.subr.mxu0 0.0
    %530 = vmatpush1.xpose.msra.mxu0 0.0
    %531 = vmatprep.subr.mxu0 0.0
    %532 = vmatpush1.xpose.msra.mxu0 0.0
    %533 = vmatprep.mubr.f32.mxu0 0.0
    %534 = vmatmul.mubr.f32.gmra.mrb[0].mxu0 %v465
    %v535 = vpop.f32.mrb[0].mxu0
    %v536 = vadd.f32 0.0, %v535
    %v537 = vpop.f32.mrb[0].mxu0
    %538 = vdwg.mxu0
    %v539 = vmul.f32 %v536, 0.35355338
    %v540 = vsel %vm132, %v539, -inf
    %541 = vmax.xlane.f32.xlu0 %v540
    %v542 = vpop.xlane.xlu0 %541
    %v543 = vsub.f32 %v539, %v542
    %v544 = vmul.f32 %v543, 1.442695
    %v545 = vpow.pop %v544
    %v546 = vsel %vm132, %v545, 0.0
    %547 = vadd.xlane.f32.xlu0 %v546
    %v548 = vpop.xlane.xlu0 %547
    %v549 = vrcp.pop %v548
    %v550 = vmul.f32 %v545, %v549
    %551 = vrot.lane.b32.xlu0 %v121, 48
    %v552 = vpop.permute.xlu0 %551
    %v555 = vsel %vm132, %v550, 0
    %557 = vmatprep.subr.mxu0 0.0
    %558 = vmatpush1.msra.mxu0 %v552
    %559 = vmatprep.subr.mxu0 0.0
    %560 = vmatpush1.msra.mxu0 0.0
    %561 = vmatprep.subr.mxu0 0.0
    %562 = vmatpush1.msra.mxu0 0.0
    %563 = vmatprep.subr.mxu0 0.0
    %564 = vmatpush1.msra.mxu0 0.0
    %565 = vmatprep.subr.mxu0 0.0
    %566 = vmatpush1.msra.mxu0 0.0
    %567 = vmatprep.subr.mxu0 0.0
    %568 = vmatpush1.msra.mxu0 0.0
    %569 = vmatprep.subr.mxu0 0.0
    %570 = vmatpush1.msra.mxu0 0.0
    %571 = vmatprep.subr.mxu0 0.0
    %572 = vmatpush1.msra.mxu0 0.0
    %573 = vmatprep.subr.mxu0 0.0
    %574 = vmatpush1.msra.mxu0 0.0
    %575 = vmatprep.subr.mxu0 0.0
    %576 = vmatpush1.msra.mxu0 0.0
    %577 = vmatprep.subr.mxu0 0.0
    %578 = vmatpush1.msra.mxu0 0.0
    %579 = vmatprep.subr.mxu0 0.0
    %580 = vmatpush1.msra.mxu0 0.0
    %581 = vmatprep.subr.mxu0 0.0
    %582 = vmatpush1.msra.mxu0 0.0
    %583 = vmatprep.subr.mxu0 0.0
    %584 = vmatpush1.msra.mxu0 0.0
    %585 = vmatprep.subr.mxu0 0.0
    %586 = vmatpush1.msra.mxu0 0.0
    %587 = vmatprep.subr.mxu0 0.0
    %588 = vmatpush1.msra.mxu0 0.0
    %589 = vmatprep.subr.mxu0 0.0
    %590 = vmatpush1.msra.mxu0 0.0
    %591 = vmatprep.subr.mxu0 0.0
    %592 = vmatpush1.msra.mxu0 0.0
    %593 = vmatprep.subr.mxu0 0.0
    %594 = vmatpush1.msra.mxu0 0.0
    %595 = vmatprep.subr.mxu0 0.0
    %596 = vmatpush1.msra.mxu0 0.0
    %597 = vmatprep.subr.mxu0 0.0
    %598 = vmatpush1.msra.mxu0 0.0
    %599 = vmatprep.subr.mxu0 0.0
    %600 = vmatpush1.msra.mxu0 0.0
    %601 = vmatprep.subr.mxu0 0.0
    %602 = vmatpush1.msra.mxu0 0.0
    %603 = vmatprep.subr.mxu0 0.0
    %604 = vmatpush1.msra.mxu0 0.0
    %605 = vmatprep.subr.mxu0 0.0
    %606 = vmatpush1.msra.mxu0 0.0
    %607 = vmatprep.subr.mxu0 0.0
    %608 = vmatpush1.msra.mxu0 0.0
    %609 = vmatprep.subr.mxu0 0.0
    %610 = vmatpush1.msra.mxu0 0.0
    %611 = vmatprep.subr.mxu0 0.0
    %612 = vmatpush1.msra.mxu0 0.0
    %613 = vmatprep.subr.mxu0 0.0
    %614 = vmatpush1.msra.mxu0 0.0
    %615 = vmatprep.subr.mxu0 0.0
    %616 = vmatpush1.msra.mxu0 0.0
    %617 = vmatprep.subr.mxu0 0.0
    %618 = vmatpush1.msra.mxu0 0.0
    %619 = vmatprep.subr.mxu0 0.0
    %620 = vmatpush1.msra.mxu0 0.0
    %621 = vmatprep.mubr.f32.mxu0 0.0
    %622 = vmatmul.mubr.f32.gmra.mrb[0].mxu0 %v555
    %v623 = vpop.f32.mrb[0].mxu0
    %v624 = vadd.f32 0.0, %v623
    %v625 = vpop.f32.mrb[0].mxu0
    %626 = vdwg.mxu0
    %627 = vrot.lane.b32.xlu0 %v121, 104
    %v628 = vpop.permute.xlu0 %627
    %629 = vrot.lane.b32.xlu0 %v121, 72
    %v630 = vpop.permute.xlu0 %629
    %v631 = vsel %vm132, %v628, 0
    %v633 = vsel %vm132, %v630, 0
    %635 = vmatprep.subr.mxu0 0.0
    %636 = vmatpush1.xpose.msra.mxu0 %v633
    %637 = vmatprep.subr.mxu0 0.0
    %638 = vmatpush1.xpose.msra.mxu0 0.0
    %639 = vmatprep.subr.mxu0 0.0
    %640 = vmatpush1.xpose.msra.mxu0 0.0
    %641 = vmatprep.subr.mxu0 0.0
    %642 = vmatpush1.xpose.msra.mxu0 0.0
    %643 = vmatprep.subr.mxu0 0.0
    %644 = vmatpush1.xpose.msra.mxu0 0.0
    %645 = vmatprep.subr.mxu0 0.0
    %646 = vmatpush1.xpose.msra.mxu0 0.0
    %647 = vmatprep.subr.mxu0 0.0
    %648 = vmatpush1.xpose.msra.mxu0 0.0
    %649 = vmatprep.subr.mxu0 0.0
    %650 = vmatpush1.xpose.msra.mxu0 0.0
    %651 = vmatprep.subr.mxu0 0.0
    %652 = vmatpush1.xpose.msra.mxu0 0.0
    %653 = vmatprep.subr.mxu0 0.0
    %654 = vmatpush1.xpose.msra.mxu0 0.0
    %655 = vmatprep.subr.mxu0 0.0
    %656 = vmatpush1.xpose.msra.mxu0 0.0
    %657 = vmatprep.subr.mxu0 0.0
    %658 = vmatpush1.xpose.msra.mxu0 0.0
    %659 = vmatprep.subr.mxu0 0.0
    %660 = vmatpush1.xpose.msra.mxu0 0.0
    %661 = vmatprep.subr.mxu0 0.0
    %662 = vmatpush1.xpose.msra.mxu0 0.0
    %663 = vmatprep.subr.mxu0 0.0
    %664 = vmatpush1.xpose.msra.mxu0 0.0
    %665 = vmatprep.subr.mxu0 0.0
    %666 = vmatpush1.xpose.msra.mxu0 0.0
    %667 = vmatprep.subr.mxu0 0.0
    %668 = vmatpush1.xpose.msra.mxu0 0.0
    %669 = vmatprep.subr.mxu0 0.0
    %670 = vmatpush1.xpose.msra.mxu0 0.0
    %671 = vmatprep.subr.mxu0 0.0
    %672 = vmatpush1.xpose.msra.mxu0 0.0
    %673 = vmatprep.subr.mxu0 0.0
    %674 = vmatpush1.xpose.msra.mxu0 0.0
    %675 = vmatprep.subr.mxu0 0.0
    %676 = vmatpush1.xpose.msra.mxu0 0.0
    %677 = vmatprep.subr.mxu0 0.0
    %678 = vmatpush1.xpose.msra.mxu0 0.0
    %679 = vmatprep.subr.mxu0 0.0
    %680 = vmatpush1.xpose.msra.mxu0 0.0
    %681 = vmatprep.subr.mxu0 0.0
    %682 = vmatpush1.xpose.msra.mxu0 0.0
    %683 = vmatprep.subr.mxu0 0.0
    %684 = vmatpush1.xpose.msra.mxu0 0.0
    %685 = vmatprep.subr.mxu0 0.0
    %686 = vmatpush1.xpose.msra.mxu0 0.0
    %687 = vmatprep.subr.mxu0 0.0
    %688 = vmatpush1.xpose.msra.mxu0 0.0
    %689 = vmatprep.subr.mxu0 0.0
    %690 = vmatpush1.xpose.msra.mxu0 0.0
    %691 = vmatprep.subr.mxu0 0.0
    %692 = vmatpush1.xpose.msra.mxu0 0.0
    %693 = vmatprep.subr.mxu0 0.0
    %694 = vmatpush1.xpose.msra.mxu0 0.0
    %695 = vmatprep.subr.mxu0 0.0
    %696 = vmatpush1.xpose.msra.mxu0 0.0
    %697 = vmatprep.subr.mxu0 0.0
    %698 = vmatpush1.xpose.msra.mxu0 0.0
    %699 = vmatprep.mubr.f32.mxu0 0.0
    %700 = vmatmul.mubr.f32.gmra.mrb[0].mxu0 %v631
    %v701 = vpop.f32.mrb[0].mxu0
    %v702 = vadd.f32 0.0, %v701
    %v703 = vpop.f32.mrb[0].mxu0
    %704 = vdwg.mxu0
    %v705 = vmul.f32 %v702, 0.35355338
    %v706 = vsel %vm132, %v705, -inf
    %707 = vmax.xlane.f32.xlu0 %v706
    %v708 = vpop.xlane.xlu0 %707
    %v709 = vsub.f32 %v705, %v708
    %v710 = vmul.f32 %v709, 1.442695
    %v711 = vpow.pop %v710
    %v712 = vsel %vm132, %v711, 0.0
    %713 = vadd.xlane.f32.xlu0 %v712
    %v714 = vpop.xlane.xlu0 %713
    %v715 = vrcp.pop %v714
    %v716 = vmul.f32 %v711, %v715
    %717 = vrot.lane.b32.xlu0 %v121, 40
    %v718 = vpop.permute.xlu0 %717
    %v721 = vsel %vm132, %v716, 0
    %723 = vmatprep.subr.mxu0 0.0
    %724 = vmatpush1.msra.mxu0 %v718
    %725 = vmatprep.subr.mxu0 0.0
    %726 = vmatpush1.msra.mxu0 0.0
    %727 = vmatprep.subr.mxu0 0.0
    %728 = vmatpush1.msra.mxu0 0.0
    %729 = vmatprep.subr.mxu0 0.0
    %730 = vmatpush1.msra.mxu0 0.0
    %731 = vmatprep.subr.mxu0 0.0
    %732 = vmatpush1.msra.mxu0 0.0
    %733 = vmatprep.subr.mxu0 0.0
    %734 = vmatpush1.msra.mxu0 0.0
    %735 = vmatprep.subr.mxu0 0.0
    %736 = vmatpush1.msra.mxu0 0.0
    %737 = vmatprep.subr.mxu0 0.0
    %738 = vmatpush1.msra.mxu0 0.0
    %739 = vmatprep.subr.mxu0 0.0
    %740 = vmatpush1.msra.mxu0 0.0
    %741 = vmatprep.subr.mxu0 0.0
    %742 = vmatpush1.msra.mxu0 0.0
    %743 = vmatprep.subr.mxu0 0.0
    %744 = vmatpush1.msra.mxu0 0.0
    %745 = vmatprep.subr.mxu0 0.0
    %746 = vmatpush1.msra.mxu0 0.0
    %747 = vmatprep.subr.mxu0 0.0
    %748 = vmatpush1.msra.mxu0 0.0
    %749 = vmatprep.subr.mxu0 0.0
    %750 = vmatpush1.msra.mxu0 0.0
    %751 = vmatprep.subr.mxu0 0.0
    %752 = vmatpush1.msra.mxu0 0.0
    %753 = vmatprep.subr.mxu0 0.0
    %754 = vmatpush1.msra.mxu0 0.0
    %755 = vmatprep.subr.mxu0 0.0
    %756 = vmatpush1.msra.mxu0 0.0
    %757 = vmatprep.subr.mxu0 0.0
    %758 = vmatpush1.msra.mxu0 0.0
    %759 = vmatprep.subr.mxu0 0.0
    %760 = vmatpush1.msra.mxu0 0.0
    %761 = vmatprep.subr.mxu0 0.0
    %762 = vmatpush1.msra.mxu0 0.0
    %763 = vmatprep.subr.mxu0 0.0
    %764 = vmatpush1.msra.mxu0 0.0
    %765 = vmatprep.subr.mxu0 0.0
    %766 = vmatpush1.msra.mxu0 0.0
    %767 = vmatprep.subr.mxu0 0.0
    %768 = vmatpush1.msra.mxu0 0.0
    %769 = vmatprep.subr.mxu0 0.0
    %770 = vmatpush1.msra.mxu0 0.0
    %771 = vmatprep.subr.mxu0 0.0
    %772 = vmatpush1.msra.mxu0 0.0
    %773 = vmatprep.subr.mxu0 0.0
    %774 = vmatpush1.msra.mxu0 0.0
    %775 = vmatprep.subr.mxu0 0.0
    %776 = vmatpush1.msra.mxu0 0.0
    %777 = vmatprep.subr.mxu0 0.0
    %778 = vmatpush1.msra.mxu0 0.0
    %779 = vmatprep.subr.mxu0 0.0
    %780 = vmatpush1.msra.mxu0 0.0
    %781 = vmatprep.subr.mxu0 0.0
    %782 = vmatpush1.msra.mxu0 0.0
    %783 = vmatprep.subr.mxu0 0.0
    %784 = vmatpush1.msra.mxu0 0.0
    %785 = vmatprep.subr.mxu0 0.0
    %786 = vmatpush1.msra.mxu0 0.0
    %787 = vmatprep.mubr.f32.mxu0 0.0
    %788 = vmatmul.mubr.f32.gmra.mrb[0].mxu0 %v721
    %v789 = vpop.f32.mrb[0].mxu0
    %v790 = vadd.f32 0.0, %v789
    %v791 = vpop.f32.mrb[0].mxu0
    %792 = vdwg.mxu0
    %794 = vrot.lane.b32.xlu0 %v458, 8
    %v795 = vpop.permute.xlu0 %794
    %798 = vrot.lane.b32.xlu0 %v624, 16
    %v799 = vpop.permute.xlu0 %798
    %802 = vrot.lane.b32.xlu0 %v790, 24
    %v803 = vpop.permute.xlu0 %802
    %v805 = vsel %vm132, %v292, %v795
    %vm806 = vcmask 130048
    %v807 = vsel %vm806, %v805, %v799
    %vm808 = vcmask 195584
    %v809 = vsel %vm808, %v807, %v803
    %811 = vrot.lane.b32.xlu0 %v126, 96
    %v812 = vpop.permute.xlu0 %811
    %v813 = vsel %vm132, %v126, 0
    %v815 = vsel %vm132, %v812, 0
    %817 = vmatprep.subr.mxu0 0.0
    %818 = vmatpush1.xpose.msra.mxu0 %v815
    %819 = vmatprep.subr.mxu0 0.0
    %820 = vmatpush1.xpose.msra.mxu0 0.0
    %821 = vmatprep.subr.mxu0 0.0
    %822 = vmatpush1.xpose.msra.mxu0 0.0
    %823 = vmatprep.subr.mxu0 0.0
    %824 = vmatpush1.xpose.msra.mxu0 0.0
    %825 = vmatprep.subr.mxu0 0.0
    %826 = vmatpush1.xpose.msra.mxu0 0.0
    %827 = vmatprep.subr.mxu0 0.0
    %828 = vmatpush1.xpose.msra.mxu0 0.0
    %829 = vmatprep.subr.mxu0 0.0
    %830 = vmatpush1.xpose.msra.mxu0 0.0
    %831 = vmatprep.subr.mxu0 0.0
    %832 = vmatpush1.xpose.msra.mxu0 0.0
    %833 = vmatprep.subr.mxu0 0.0
    %834 = vmatpush1.xpose.msra.mxu0 0.0
    %835 = vmatprep.subr.mxu0 0.0
    %836 = vmatpush1.xpose.msra.mxu0 0.0
    %837 = vmatprep.subr.mxu0 0.0
    %838 = vmatpush1.xpose.msra.mxu0 0.0
    %839 = vmatprep.subr.mxu0 0.0
    %840 = vmatpush1.xpose.msra.mxu0 0.0
    %841 = vmatprep.subr.mxu0 0.0
    %842 = vmatpush1.xpose.msra.mxu0 0.0
    %843 = vmatprep.subr.mxu0 0.0
    %844 = vmatpush1.xpose.msra.mxu0 0.0
    %845 = vmatprep.subr.mxu0 0.0
    %846 = vmatpush1.xpose.msra.mxu0 0.0
    %847 = vmatprep.subr.mxu0 0.0
    %848 = vmatpush1.xpose.msra.mxu0 0.0
    %849 = vmatprep.subr.mxu0 0.0
    %850 = vmatpush1.xpose.msra.mxu0 0.0
    %851 = vmatprep.subr.mxu0 0.0
    %852 = vmatpush1.xpose.msra.mxu0 0.0
    %853 = vmatprep.subr.mxu0 0.0
    %854 = vmatpush1.xpose.msra.mxu0 0.0
    %855 = vmatprep.subr.mxu0 0.0
    %856 = vmatpush1.xpose.msra.mxu0 0.0
    %857 = vmatprep.subr.mxu0 0.0
    %858 = vmatpush1.xpose.msra.mxu0 0.0
    %859 = vmatprep.subr.mxu0 0.0
    %860 = vmatpush1.xpose.msra.mxu0 0.0
    %861 = vmatprep.subr.mxu0 0.0
    %862 = vmatpush1.xpose.msra.mxu0 0.0
    %863 = vmatprep.subr.mxu0 0.0
    %864 = vmatpush1.xpose.msra.mxu0 0.0
    %865 = vmatprep.subr.mxu0 0.0
    %866 = vmatpush1.xpose.msra.mxu0 0.0
    %867 = vmatprep.subr.mxu0 0.0
    %868 = vmatpush1.xpose.msra.mxu0 0.0
    %869 = vmatprep.subr.mxu0 0.0
    %870 = vmatpush1.xpose.msra.mxu0 0.0
    %871 = vmatprep.subr.mxu0 0.0
    %872 = vmatpush1.xpose.msra.mxu0 0.0
    %873 = vmatprep.subr.mxu0 0.0
    %874 = vmatpush1.xpose.msra.mxu0 0.0
    %875 = vmatprep.subr.mxu0 0.0
    %876 = vmatpush1.xpose.msra.mxu0 0.0
    %877 = vmatprep.subr.mxu0 0.0
    %878 = vmatpush1.xpose.msra.mxu0 0.0
    %879 = vmatprep.subr.mxu0 0.0
    %880 = vmatpush1.xpose.msra.mxu0 0.0
    %881 = vmatprep.mubr.f32.mxu0 0.0
    %882 = vmatmul.mubr.f32.gmra.mrb[0].mxu0 %v813
    %v883 = vpop.f32.mrb[0].mxu0
    %v884 = vadd.f32 0.0, %v883
    %v885 = vpop.f32.mrb[0].mxu0
    %886 = vdwg.mxu0
    %v887 = vmul.f32 %v884, 0.35355338
    %v888 = vsel %vm132, %v887, -inf
    %889 = vmax.xlane.f32.xlu0 %v888
    %v890 = vpop.xlane.xlu0 %889
    %v891 = vsub.f32 %v887, %v890
    %v892 = vmul.f32 %v891, 1.442695
    %v893 = vpow.pop %v892
    %v894 = vsel %vm132, %v893, 0.0
    %895 = vadd.xlane.f32.xlu0 %v894
    %v896 = vpop.xlane.xlu0 %895
    %v897 = vrcp.pop %v896
    %v898 = vmul.f32 %v893, %v897
    %899 = vrot.lane.b32.xlu0 %v126, 64
    %v900 = vpop.permute.xlu0 %899
    %v903 = vsel %vm132, %v898, 0
    %905 = vmatprep.subr.mxu0 0.0
    %906 = vmatpush1.msra.mxu0 %v900
    %907 = vmatprep.subr.mxu0 0.0
    %908 = vmatpush1.msra.mxu0 0.0
    %909 = vmatprep.subr.mxu0 0.0
    %910 = vmatpush1.msra.mxu0 0.0
    %911 = vmatprep.subr.mxu0 0.0
    %912 = vmatpush1.msra.mxu0 0.0
    %913 = vmatprep.subr.mxu0 0.0
    %914 = vmatpush1.msra.mxu0 0.0
    %915 = vmatprep.subr.mxu0 0.0
    %916 = vmatpush1.msra.mxu0 0.0
    %917 = vmatprep.subr.mxu0 0.0
    %918 = vmatpush1.msra.mxu0 0.0
    %919 = vmatprep.subr.mxu0 0.0
    %920 = vmatpush1.msra.mxu0 0.0
    %921 = vmatprep.subr.mxu0 0.0
    %922 = vmatpush1.msra.mxu0 0.0
    %923 = vmatprep.subr.mxu0 0.0
    %924 = vmatpush1.msra.mxu0 0.0
    %925 = vmatprep.subr.mxu0 0.0
    %926 = vmatpush1.msra.mxu0 0.0
    %927 = vmatprep.subr.mxu0 0.0
    %928 = vmatpush1.msra.mxu0 0.0
    %929 = vmatprep.subr.mxu0 0.0
    %930 = vmatpush1.msra.mxu0 0.0
    %931 = vmatprep.subr.mxu0 0.0
    %932 = vmatpush1.msra.mxu0 0.0
    %933 = vmatprep.subr.mxu0 0.0
    %934 = vmatpush1.msra.mxu0 0.0
    %935 = vmatprep.subr.mxu0 0.0
    %936 = vmatpush1.msra.mxu0 0.0
    %937 = vmatprep.subr.mxu0 0.0
    %938 = vmatpush1.msra.mxu0 0.0
    %939 = vmatprep.subr.mxu0 0.0
    %940 = vmatpush1.msra.mxu0 0.0
    %941 = vmatprep.subr.mxu0 0.0
    %942 = vmatpush1.msra.mxu0 0.0
    %943 = vmatprep.subr.mxu0 0.0
    %944 = vmatpush1.msra.mxu0 0.0
    %945 = vmatprep.subr.mxu0 0.0
    %946 = vmatpush1.msra.mxu0 0.0
    %947 = vmatprep.subr.mxu0 0.0
    %948 = vmatpush1.msra.mxu0 0.0
    %949 = vmatprep.subr.mxu0 0.0
    %950 = vmatpush1.msra.mxu0 0.0
    %951 = vmatprep.subr.mxu0 0.0
    %952 = vmatpush1.msra.mxu0 0.0
    %953 = vmatprep.subr.mxu0 0.0
    %954 = vmatpush1.msra.mxu0 0.0
    %955 = vmatprep.subr.mxu0 0.0
    %956 = vmatpush1.msra.mxu0 0.0
    %957 = vmatprep.subr.mxu0 0.0
    %958 = vmatpush1.msra.mxu0 0.0
    %959 = vmatprep.subr.mxu0 0.0
    %960 = vmatpush1.msra.mxu0 0.0
    %961 = vmatprep.subr.mxu0 0.0
    %962 = vmatpush1.msra.mxu0 0.0
    %963 = vmatprep.subr.mxu0 0.0
    %964 = vmatpush1.msra.mxu0 0.0
    %965 = vmatprep.subr.mxu0 0.0
    %966 = vmatpush1.msra.mxu0 0.0
    %967 = vmatprep.subr.mxu0 0.0
    %968 = vmatpush1.msra.mxu0 0.0
    %969 = vmatprep.mubr.f32.mxu0 0.0
    %970 = vmatmul.mubr.f32.gmra.mrb[0].mxu0 %v903
    %v971 = vpop.f32.mrb[0].mxu0
    %v972 = vadd.f32 0.0, %v971
    %v973 = vpop.f32.mrb[0].mxu0
    %974 = vdwg.mxu0
    %975 = vrot.lane.b32.xlu0 %v126, 120
    %v976 = vpop.permute.xlu0 %975
    %977 = vrot.lane.b32.xlu0 %v126, 88
    %v978 = vpop.permute.xlu0 %977
    %v979 = vsel %vm132, %v976, 0
    %v981 = vsel %vm132, %v978, 0
    %983 = vmatprep.subr.mxu0 0.0
    %984 = vmatpush1.xpose.msra.mxu0 %v981
    %985 = vmatprep.subr.mxu0 0.0
    %986 = vmatpush1.xpose.msra.mxu0 0.0
    %987 = vmatprep.subr.mxu0 0.0
    %988 = vmatpush1.xpose.msra.mxu0 0.0
    %989 = vmatprep.subr.mxu0 0.0
    %990 = vmatpush1.xpose.msra.mxu0 0.0
    %991 = vmatprep.subr.mxu0 0.0
    %992 = vmatpush1.xpose.msra.mxu0 0.0
    %993 = vmatprep.subr.mxu0 0.0
    %994 = vmatpush1.xpose.msra.mxu0 0.0
    %995 = vmatprep.subr.mxu0 0.0
    %996 = vmatpush1.xpose.msra.mxu0 0.0
    %997 = vmatprep.subr.mxu0 0.0
    %998 = vmatpush1.xpose.msra.mxu0 0.0
    %999 = vmatprep.subr.mxu0 0.0
    %1000 = vmatpush1.xpose.msra.mxu0 0.0
    %1001 = vmatprep.subr.mxu0 0.0
    %1002 = vmatpush1.xpose.msra.mxu0 0.0
    %1003 = vmatprep.subr.mxu0 0.0
    %1004 = vmatpush1.xpose.msra.mxu0 0.0
    %1005 = vmatprep.subr.mxu0 0.0
    %1006 = vmatpush1.xpose.msra.mxu0 0.0
    %1007 = vmatprep.subr.mxu0 0.0
    %1008 = vmatpush1.xpose.msra.mxu0 0.0
    %1009 = vmatprep.subr.mxu0 0.0
    %1010 = vmatpush1.xpose.msra.mxu0 0.0
    %1011 = vmatprep.subr.mxu0 0.0
    %1012 = vmatpush1.xpose.msra.mxu0 0.0
    %1013 = vmatprep.subr.mxu0 0.0
    %1014 = vmatpush1.xpose.msra.mxu0 0.0
    %1015 = vmatprep.subr.mxu0 0.0
    %1016 = vmatpush1.xpose.msra.mxu0 0.0
    %1017 = vmatprep.subr.mxu0 0.0
    %1018 = vmatpush1.xpose.msra.mxu0 0.0
    %1019 = vmatprep.subr.mxu0 0.0
    %1020 = vmatpush1.xpose.msra.mxu0 0.0
    %1021 = vmatprep.subr.mxu0 0.0
    %1022 = vmatpush1.xpose.msra.mxu0 0.0
    %1023 = vmatprep.subr.mxu0 0.0
    %1024 = vmatpush1.xpose.msra.mxu0 0.0
    %1025 = vmatprep.subr.mxu0 0.0
    %1026 = vmatpush1.xpose.msra.mxu0 0.0
    %1027 = vmatprep.subr.mxu0 0.0
    %1028 = vmatpush1.xpose.msra.mxu0 0.0
    %1029 = vmatprep.subr.mxu0 0.0
    %1030 = vmatpush1.xpose.msra.mxu0 0.0
    %1031 = vmatprep.subr.mxu0 0.0
    %1032 = vmatpush1.xpose.msra.mxu0 0.0
    %1033 = vmatprep.subr.mxu0 0.0
    %1034 = vmatpush1.xpose.msra.mxu0 0.0
    %1035 = vmatprep.subr.mxu0 0.0
    %1036 = vmatpush1.xpose.msra.mxu0 0.0
    %1037 = vmatprep.subr.mxu0 0.0
    %1038 = vmatpush1.xpose.msra.mxu0 0.0
    %1039 = vmatprep.subr.mxu0 0.0
    %1040 = vmatpush1.xpose.msra.mxu0 0.0
    %1041 = vmatprep.subr.mxu0 0.0
    %1042 = vmatpush1.xpose.msra.mxu0 0.0
    %1043 = vmatprep.subr.mxu0 0.0
    %1044 = vmatpush1.xpose.msra.mxu0 0.0
    %1045 = vmatprep.subr.mxu0 0.0
    %1046 = vmatpush1.xpose.msra.mxu0 0.0
    %1047 = vmatprep.mubr.f32.mxu0 0.0
    %1048 = vmatmul.mubr.f32.gmra.mrb[0].mxu0 %v979
    %v1049 = vpop.f32.mrb[0].mxu0
    %v1050 = vadd.f32 0.0, %v1049
    %v1051 = vpop.f32.mrb[0].mxu0
    %1052 = vdwg.mxu0
    %v1053 = vmul.f32 %v1050, 0.35355338
    %v1054 = vsel %vm132, %v1053, -inf
    %1055 = vmax.xlane.f32.xlu0 %v1054
    %v1056 = vpop.xlane.xlu0 %1055
    %v1057 = vsub.f32 %v1053, %v1056
    %v1058 = vmul.f32 %v1057, 1.442695
    %v1059 = vpow.pop %v1058
    %v1060 = vsel %vm132, %v1059, 0.0
    %1061 = vadd.xlane.f32.xlu0 %v1060
    %v1062 = vpop.xlane.xlu0 %1061
    %v1063 = vrcp.pop %v1062
    %v1064 = vmul.f32 %v1059, %v1063
    %1065 = vrot.lane.b32.xlu0 %v126, 56
    %v1066 = vpop.permute.xlu0 %1065
    %v1069 = vsel %vm132, %v1064, 0
    %1071 = vmatprep.subr.mxu0 0.0
    %1072 = vmatpush1.msra.mxu0 %v1066
    %1073 = vmatprep.subr.mxu0 0.0
    %1074 = vmatpush1.msra.mxu0 0.0
    %1075 = vmatprep.subr.mxu0 0.0
    %1076 = vmatpush1.msra.mxu0 0.0
    %1077 = vmatprep.subr.mxu0 0.0
    %1078 = vmatpush1.msra.mxu0 0.0
    %1079 = vmatprep.subr.mxu0 0.0
    %1080 = vmatpush1.msra.mxu0 0.0
    %1081 = vmatprep.subr.mxu0 0.0
    %1082 = vmatpush1.msra.mxu0 0.0
    %1083 = vmatprep.subr.mxu0 0.0
    %1084 = vmatpush1.msra.mxu0 0.0
    %1085 = vmatprep.subr.mxu0 0.0
    %1086 = vmatpush1.msra.mxu0 0.0
    %1087 = vmatprep.subr.mxu0 0.0
    %1088 = vmatpush1.msra.mxu0 0.0
    %1089 = vmatprep.subr.mxu0 0.0
    %1090 = vmatpush1.msra.mxu0 0.0
    %1091 = vmatprep.subr.mxu0 0.0
    %1092 = vmatpush1.msra.mxu0 0.0
    %1093 = vmatprep.subr.mxu0 0.0
    %1094 = vmatpush1.msra.mxu0 0.0
    %1095 = vmatprep.subr.mxu0 0.0
    %1096 = vmatpush1.msra.mxu0 0.0
    %1097 = vmatprep.subr.mxu0 0.0
    %1098 = vmatpush1.msra.mxu0 0.0
    %1099 = vmatprep.subr.mxu0 0.0
    %1100 = vmatpush1.msra.mxu0 0.0
    %1101 = vmatprep.subr.mxu0 0.0
    %1102 = vmatpush1.msra.mxu0 0.0
    %1103 = vmatprep.subr.mxu0 0.0
    %1104 = vmatpush1.msra.mxu0 0.0
    %1105 = vmatprep.subr.mxu0 0.0
    %1106 = vmatpush1.msra.mxu0 0.0
    %1107 = vmatprep.subr.mxu0 0.0
    %1108 = vmatpush1.msra.mxu0 0.0
    %1109 = vmatprep.subr.mxu0 0.0
    %1110 = vmatpush1.msra.mxu0 0.0
    %1111 = vmatprep.subr.mxu0 0.0
    %1112 = vmatpush1.msra.mxu0 0.0
    %1113 = vmatprep.subr.mxu0 0.0
    %1114 = vmatpush1.msra.mxu0 0.0
    %1115 = vmatprep.subr.mxu0 0.0
    %1116 = vmatpush1.msra.mxu0 0.0
    %1117 = vmatprep.subr.mxu0 0.0
    %1118 = vmatpush1.msra.mxu0 0.0
    %1119 = vmatprep.subr.mxu0 0.0
    %1120 = vmatpush1.msra.mxu0 0.0
    %1121 = vmatprep.subr.mxu0 0.0
    %1122 = vmatpush1.msra.mxu0 0.0
    %1123 = vmatprep.subr.mxu0 0.0
    %1124 = vmatpush1.msra.mxu0 0.0
    %1125 = vmatprep.subr.mxu0 0.0
    %1126 = vmatpush1.msra.mxu0 0.0
    %1127 = vmatprep.subr.mxu0 0.0
    %1128 = vmatpush1.msra.mxu0 0.0
    %1129 = vmatprep.subr.mxu0 0.0
    %1130 = vmatpush1.msra.mxu0 0.0
    %1131 = vmatprep.subr.mxu0 0.0
    %1132 = vmatpush1.msra.mxu0 0.0
    %1133 = vmatprep.subr.mxu0 0.0
    %1134 = vmatpush1.msra.mxu0 0.0
    %1135 = vmatprep.mubr.f32.mxu0 0.0
    %1136 = vmatmul.mubr.f32.gmra.mrb[0].mxu0 %v1069
    %v1137 = vpop.f32.mrb[0].mxu0
    %v1138 = vadd.f32 0.0, %v1137
    %v1139 = vpop.f32.mrb[0].mxu0
    %1140 = vdwg.mxu0
    %1141 = vrot.lane.b32.xlu0 %v126, 112
    %v1142 = vpop.permute.xlu0 %1141
    %1143 = vrot.lane.b32.xlu0 %v126, 80
    %v1144 = vpop.permute.xlu0 %1143
    %v1145 = vsel %vm132, %v1142, 0
    %v1147 = vsel %vm132, %v1144, 0
    %1149 = vmatprep.subr.mxu0 0.0
    %1150 = vmatpush1.xpose.msra.mxu0 %v1147
    %1151 = vmatprep.subr.mxu0 0.0
    %1152 = vmatpush1.xpose.msra.mxu0 0.0
    %1153 = vmatprep.subr.mxu0 0.0
    %1154 = vmatpush1.xpose.msra.mxu0 0.0
    %1155 = vmatprep.subr.mxu0 0.0
    %1156 = vmatpush1.xpose.msra.mxu0 0.0
    %1157 = vmatprep.subr.mxu0 0.0
    %1158 = vmatpush1.xpose.msra.mxu0 0.0
    %1159 = vmatprep.subr.mxu0 0.0
    %1160 = vmatpush1.xpose.msra.mxu0 0.0
    %1161 = vmatprep.subr.mxu0 0.0
    %1162 = vmatpush1.xpose.msra.mxu0 0.0
    %1163 = vmatprep.subr.mxu0 0.0
    %1164 = vmatpush1.xpose.msra.mxu0 0.0
    %1165 = vmatprep.subr.mxu0 0.0
    %1166 = vmatpush1.xpose.msra.mxu0 0.0
    %1167 = vmatprep.subr.mxu0 0.0
    %1168 = vmatpush1.xpose.msra.mxu0 0.0
    %1169 = vmatprep.subr.mxu0 0.0
    %1170 = vmatpush1.xpose.msra.mxu0 0.0
    %1171 = vmatprep.subr.mxu0 0.0
    %1172 = vmatpush1.xpose.msra.mxu0 0.0
    %1173 = vmatprep.subr.mxu0 0.0
    %1174 = vmatpush1.xpose.msra.mxu0 0.0
    %1175 = vmatprep.subr.mxu0 0.0
    %1176 = vmatpush1.xpose.msra.mxu0 0.0
    %1177 = vmatprep.subr.mxu0 0.0
    %1178 = vmatpush1.xpose.msra.mxu0 0.0
    %1179 = vmatprep.subr.mxu0 0.0
    %1180 = vmatpush1.xpose.msra.mxu0 0.0
    %1181 = vmatprep.subr.mxu0 0.0
    %1182 = vmatpush1.xpose.msra.mxu0 0.0
    %1183 = vmatprep.subr.mxu0 0.0
    %1184 = vmatpush1.xpose.msra.mxu0 0.0
    %1185 = vmatprep.subr.mxu0 0.0
    %1186 = vmatpush1.xpose.msra.mxu0 0.0
    %1187 = vmatprep.subr.mxu0 0.0
    %1188 = vmatpush1.xpose.msra.mxu0 0.0
    %1189 = vmatprep.subr.mxu0 0.0
    %1190 = vmatpush1.xpose.msra.mxu0 0.0
    %1191 = vmatprep.subr.mxu0 0.0
    %1192 = vmatpush1.xpose.msra.mxu0 0.0
    %1193 = vmatprep.subr.mxu0 0.0
    %1194 = vmatpush1.xpose.msra.mxu0 0.0
    %1195 = vmatprep.subr.mxu0 0.0
    %1196 = vmatpush1.xpose.msra.mxu0 0.0
    %1197 = vmatprep.subr.mxu0 0.0
    %1198 = vmatpush1.xpose.msra.mxu0 0.0
    %1199 = vmatprep.subr.mxu0 0.0
    %1200 = vmatpush1.xpose.msra.mxu0 0.0
    %1201 = vmatprep.subr.mxu0 0.0
    %1202 = vmatpush1.xpose.msra.mxu0 0.0
    %1203 = vmatprep.subr.mxu0 0.0
    %1204 = vmatpush1.xpose.msra.mxu0 0.0
    %1205 = vmatprep.subr.mxu0 0.0
    %1206 = vmatpush1.xpose.msra.mxu0 0.0
    %1207 = vmatprep.subr.mxu0 0.0
    %1208 = vmatpush1.xpose.msra.mxu0 0.0
    %1209 = vmatprep.subr.mxu0 0.0
    %1210 = vmatpush1.xpose.msra.mxu0 0.0
    %1211 = vmatprep.subr.mxu0 0.0
    %1212 = vmatpush1.xpose.msra.mxu0 0.0
    %1213 = vmatprep.mubr.f32.mxu0 0.0
    %1214 = vmatmul.mubr.f32.gmra.mrb[0].mxu0 %v1145
    %v1215 = vpop.f32.mrb[0].mxu0
    %v1216 = vadd.f32 0.0, %v1215
    %v1217 = vpop.f32.mrb[0].mxu0
    %1218 = vdwg.mxu0
    %v1219 = vmul.f32 %v1216, 0.35355338
    %v1220 = vsel %vm132, %v1219, -inf
    %1221 = vmax.xlane.f32.xlu0 %v1220
    %v1222 = vpop.xlane.xlu0 %1221
    %v1223 = vsub.f32 %v1219, %v1222
    %v1224 = vmul.f32 %v1223, 1.442695
    %v1225 = vpow.pop %v1224
    %v1226 = vsel %vm132, %v1225, 0.0
    %1227 = vadd.xlane.f32.xlu0 %v1226
    %v1228 = vpop.xlane.xlu0 %1227
    %v1229 = vrcp.pop %v1228
    %v1230 = vmul.f32 %v1225, %v1229
    %1231 = vrot.lane.b32.xlu0 %v126, 48
    %v1232 = vpop.permute.xlu0 %1231
    %v1235 = vsel %vm132, %v1230, 0
    %1237 = vmatprep.subr.mxu0 0.0
    %1238 = vmatpush1.msra.mxu0 %v1232
    %1239 = vmatprep.subr.mxu0 0.0
    %1240 = vmatpush1.msra.mxu0 0.0
    %1241 = vmatprep.subr.mxu0 0.0
    %1242 = vmatpush1.msra.mxu0 0.0
    %1243 = vmatprep.subr.mxu0 0.0
    %1244 = vmatpush1.msra.mxu0 0.0
    %1245 = vmatprep.subr.mxu0 0.0
    %1246 = vmatpush1.msra.mxu0 0.0
    %1247 = vmatprep.subr.mxu0 0.0
    %1248 = vmatpush1.msra.mxu0 0.0
    %1249 = vmatprep.subr.mxu0 0.0
    %1250 = vmatpush1.msra.mxu0 0.0
    %1251 = vmatprep.subr.mxu0 0.0
    %1252 = vmatpush1.msra.mxu0 0.0
    %1253 = vmatprep.subr.mxu0 0.0
    %1254 = vmatpush1.msra.mxu0 0.0
    %1255 = vmatprep.subr.mxu0 0.0
    %1256 = vmatpush1.msra.mxu0 0.0
    %1257 = vmatprep.subr.mxu0 0.0
    %1258 = vmatpush1.msra.mxu0 0.0
    %1259 = vmatprep.subr.mxu0 0.0
    %1260 = vmatpush1.msra.mxu0 0.0
    %1261 = vmatprep.subr.mxu0 0.0
    %1262 = vmatpush1.msra.mxu0 0.0
    %1263 = vmatprep.subr.mxu0 0.0
    %1264 = vmatpush1.msra.mxu0 0.0
    %1265 = vmatprep.subr.mxu0 0.0
    %1266 = vmatpush1.msra.mxu0 0.0
    %1267 = vmatprep.subr.mxu0 0.0
    %1268 = vmatpush1.msra.mxu0 0.0
    %1269 = vmatprep.subr.mxu0 0.0
    %1270 = vmatpush1.msra.mxu0 0.0
    %1271 = vmatprep.subr.mxu0 0.0
    %1272 = vmatpush1.msra.mxu0 0.0
    %1273 = vmatprep.subr.mxu0 0.0
    %1274 = vmatpush1.msra.mxu0 0.0
    %1275 = vmatprep.subr.mxu0 0.0
    %1276 = vmatpush1.msra.mxu0 0.0
    %1277 = vmatprep.subr.mxu0 0.0
    %1278 = vmatpush1.msra.mxu0 0.0
    %1279 = vmatprep.subr.mxu0 0.0
    %1280 = vmatpush1.msra.mxu0 0.0
    %1281 = vmatprep.subr.mxu0 0.0
    %1282 = vmatpush1.msra.mxu0 0.0
    %1283 = vmatprep.subr.mxu0 0.0
    %1284 = vmatpush1.msra.mxu0 0.0
    %1285 = vmatprep.subr.mxu0 0.0
    %1286 = vmatpush1.msra.mxu0 0.0
    %1287 = vmatprep.subr.mxu0 0.0
    %1288 = vmatpush1.msra.mxu0 0.0
    %1289 = vmatprep.subr.mxu0 0.0
    %1290 = vmatpush1.msra.mxu0 0.0
    %1291 = vmatprep.subr.mxu0 0.0
    %1292 = vmatpush1.msra.mxu0 0.0
    %1293 = vmatprep.subr.mxu0 0.0
    %1294 = vmatpush1.msra.mxu0 0.0
    %1295 = vmatprep.subr.mxu0 0.0
    %1296 = vmatpush1.msra.mxu0 0.0
    %1297 = vmatprep.subr.mxu0 0.0
    %1298 = vmatpush1.msra.mxu0 0.0
    %1299 = vmatprep.subr.mxu0 0.0
    %1300 = vmatpush1.msra.mxu0 0.0
    %1301 = vmatprep.mubr.f32.mxu0 0.0
    %1302 = vmatmul.mubr.f32.gmra.mrb[0].mxu0 %v1235
    %v1303 = vpop.f32.mrb[0].mxu0
    %v1304 = vadd.f32 0.0, %v1303
    %v1305 = vpop.f32.mrb[0].mxu0
    %1306 = vdwg.mxu0
    %1307 = vrot.lane.b32.xlu0 %v126, 104
    %v1308 = vpop.permute.xlu0 %1307
    %1309 = vrot.lane.b32.xlu0 %v126, 72
    %v1310 = vpop.permute.xlu0 %1309
    %v1311 = vsel %vm132, %v1308, 0
    %v1313 = vsel %vm132, %v1310, 0
    %1315 = vmatprep.subr.mxu0 0.0
    %1316 = vmatpush1.xpose.msra.mxu0 %v1313
    %1317 = vmatprep.subr.mxu0 0.0
    %1318 = vmatpush1.xpose.msra.mxu0 0.0
    %1319 = vmatprep.subr.mxu0 0.0
    %1320 = vmatpush1.xpose.msra.mxu0 0.0
    %1321 = vmatprep.subr.mxu0 0.0
    %1322 = vmatpush1.xpose.msra.mxu0 0.0
    %1323 = vmatprep.subr.mxu0 0.0
    %1324 = vmatpush1.xpose.msra.mxu0 0.0
    %1325 = vmatprep.subr.mxu0 0.0
    %1326 = vmatpush1.xpose.msra.mxu0 0.0
    %1327 = vmatprep.subr.mxu0 0.0
    %1328 = vmatpush1.xpose.msra.mxu0 0.0
    %1329 = vmatprep.subr.mxu0 0.0
    %1330 = vmatpush1.xpose.msra.mxu0 0.0
    %1331 = vmatprep.subr.mxu0 0.0
    %1332 = vmatpush1.xpose.msra.mxu0 0.0
    %1333 = vmatprep.subr.mxu0 0.0
    %1334 = vmatpush1.xpose.msra.mxu0 0.0
    %1335 = vmatprep.subr.mxu0 0.0
    %1336 = vmatpush1.xpose.msra.mxu0 0.0
    %1337 = vmatprep.subr.mxu0 0.0
    %1338 = vmatpush1.xpose.msra.mxu0 0.0
    %1339 = vmatprep.subr.mxu0 0.0
    %1340 = vmatpush1.xpose.msra.mxu0 0.0
    %1341 = vmatprep.subr.mxu0 0.0
    %1342 = vmatpush1.xpose.msra.mxu0 0.0
    %1343 = vmatprep.subr.mxu0 0.0
    %1344 = vmatpush1.xpose.msra.mxu0 0.0
    %1345 = vmatprep.subr.mxu0 0.0
    %1346 = vmatpush1.xpose.msra.mxu0 0.0
    %1347 = vmatprep.subr.mxu0 0.0
    %1348 = vmatpush1.xpose.msra.mxu0 0.0
    %1349 = vmatprep.subr.mxu0 0.0
    %1350 = vmatpush1.xpose.msra.mxu0 0.0
    %1351 = vmatprep.subr.mxu0 0.0
    %1352 = vmatpush1.xpose.msra.mxu0 0.0
    %1353 = vmatprep.subr.mxu0 0.0
    %1354 = vmatpush1.xpose.msra.mxu0 0.0
    %1355 = vmatprep.subr.mxu0 0.0
    %1356 = vmatpush1.xpose.msra.mxu0 0.0
    %1357 = vmatprep.subr.mxu0 0.0
    %1358 = vmatpush1.xpose.msra.mxu0 0.0
    %1359 = vmatprep.subr.mxu0 0.0
    %1360 = vmatpush1.xpose.msra.mxu0 0.0
    %1361 = vmatprep.subr.mxu0 0.0
    %1362 = vmatpush1.xpose.msra.mxu0 0.0
    %1363 = vmatprep.subr.mxu0 0.0
    %1364 = vmatpush1.xpose.msra.mxu0 0.0
    %1365 = vmatprep.subr.mxu0 0.0
    %1366 = vmatpush1.xpose.msra.mxu0 0.0
    %1367 = vmatprep.subr.mxu0 0.0
    %1368 = vmatpush1.xpose.msra.mxu0 0.0
    %1369 = vmatprep.subr.mxu0 0.0
    %1370 = vmatpush1.xpose.msra.mxu0 0.0
    %1371 = vmatprep.subr.mxu0 0.0
    %1372 = vmatpush1.xpose.msra.mxu0 0.0
    %1373 = vmatprep.subr.mxu0 0.0
    %1374 = vmatpush1.xpose.msra.mxu0 0.0
    %1375 = vmatprep.subr.mxu0 0.0
    %1376 = vmatpush1.xpose.msra.mxu0 0.0
    %1377 = vmatprep.subr.mxu0 0.0
    %1378 = vmatpush1.xpose.msra.mxu0 0.0
    %1379 = vmatprep.mubr.f32.mxu0 0.0
    %1380 = vmatmul.mubr.f32.gmra.mrb[0].mxu0 %v1311
    %v1381 = vpop.f32.mrb[0].mxu0
    %v1382 = vadd.f32 0.0, %v1381
    %v1383 = vpop.f32.mrb[0].mxu0
    %1384 = vdwg.mxu0
    %v1385 = vmul.f32 %v1382, 0.35355338
    %v1386 = vsel %vm132, %v1385, -inf
    %1387 = vmax.xlane.f32.xlu0 %v1386
    %v1388 = vpop.xlane.xlu0 %1387
    %v1389 = vsub.f32 %v1385, %v1388
    %v1390 = vmul.f32 %v1389, 1.442695
    %v1391 = vpow.pop %v1390
    %v1392 = vsel %vm132, %v1391, 0.0
    %1393 = vadd.xlane.f32.xlu0 %v1392
    %v1394 = vpop.xlane.xlu0 %1393
    %v1395 = vrcp.pop %v1394
    %v1396 = vmul.f32 %v1391, %v1395
    %1397 = vrot.lane.b32.xlu0 %v126, 40
    %v1398 = vpop.permute.xlu0 %1397
    %v1401 = vsel %vm132, %v1396, 0
    %1403 = vmatprep.subr.mxu0 0.0
    %1404 = vmatpush1.msra.mxu0 %v1398
    %1405 = vmatprep.subr.mxu0 0.0
    %1406 = vmatpush1.msra.mxu0 0.0
    %1407 = vmatprep.subr.mxu0 0.0
    %1408 = vmatpush1.msra.mxu0 0.0
    %1409 = vmatprep.subr.mxu0 0.0
    %1410 = vmatpush1.msra.mxu0 0.0
    %1411 = vmatprep.subr.mxu0 0.0
    %1412 = vmatpush1.msra.mxu0 0.0
    %1413 = vmatprep.subr.mxu0 0.0
    %1414 = vmatpush1.msra.mxu0 0.0
    %1415 = vmatprep.subr.mxu0 0.0
    %1416 = vmatpush1.msra.mxu0 0.0
    %1417 = vmatprep.subr.mxu0 0.0
    %1418 = vmatpush1.msra.mxu0 0.0
    %1419 = vmatprep.subr.mxu0 0.0
    %1420 = vmatpush1.msra.mxu0 0.0
    %1421 = vmatprep.subr.mxu0 0.0
    %1422 = vmatpush1.msra.mxu0 0.0
    %1423 = vmatprep.subr.mxu0 0.0
    %1424 = vmatpush1.msra.mxu0 0.0
    %1425 = vmatprep.subr.mxu0 0.0
    %1426 = vmatpush1.msra.mxu0 0.0
    %1427 = vmatprep.subr.mxu0 0.0
    %1428 = vmatpush1.msra.mxu0 0.0
    %1429 = vmatprep.subr.mxu0 0.0
    %1430 = vmatpush1.msra.mxu0 0.0
    %1431 = vmatprep.subr.mxu0 0.0
    %1432 = vmatpush1.msra.mxu0 0.0
    %1433 = vmatprep.subr.mxu0 0.0
    %1434 = vmatpush1.msra.mxu0 0.0
    %1435 = vmatprep.subr.mxu0 0.0
    %1436 = vmatpush1.msra.mxu0 0.0
    %1437 = vmatprep.subr.mxu0 0.0
    %1438 = vmatpush1.msra.mxu0 0.0
    %1439 = vmatprep.subr.mxu0 0.0
    %1440 = vmatpush1.msra.mxu0 0.0
    %1441 = vmatprep.subr.mxu0 0.0
    %1442 = vmatpush1.msra.mxu0 0.0
    %1443 = vmatprep.subr.mxu0 0.0
    %1444 = vmatpush1.msra.mxu0 0.0
    %1445 = vmatprep.subr.mxu0 0.0
    %1446 = vmatpush1.msra.mxu0 0.0
    %1447 = vmatprep.subr.mxu0 0.0
    %1448 = vmatpush1.msra.mxu0 0.0
    %1449 = vmatprep.subr.mxu0 0.0
    %1450 = vmatpush1.msra.mxu0 0.0
    %1451 = vmatprep.subr.mxu0 0.0
    %1452 = vmatpush1.msra.mxu0 0.0
    %1453 = vmatprep.subr.mxu0 0.0
    %1454 = vmatpush1.msra.mxu0 0.0
    %1455 = vmatprep.subr.mxu0 0.0
    %1456 = vmatpush1.msra.mxu0 0.0
    %1457 = vmatprep.subr.mxu0 0.0
    %1458 = vmatpush1.msra.mxu0 0.0
    %1459 = vmatprep.subr.mxu0 0.0
    %1460 = vmatpush1.msra.mxu0 0.0
    %1461 = vmatprep.subr.mxu0 0.0
    %1462 = vmatpush1.msra.mxu0 0.0
    %1463 = vmatprep.subr.mxu0 0.0
    %1464 = vmatpush1.msra.mxu0 0.0
    %1465 = vmatprep.subr.mxu0 0.0
    %1466 = vmatpush1.msra.mxu0 0.0
    %1467 = vmatprep.mubr.f32.mxu0 0.0
    %1468 = vmatmul.mubr.f32.gmra.mrb[0].mxu0 %v1401
    %v1469 = vpop.f32.mrb[0].mxu0
    %v1470 = vadd.f32 0.0, %v1469
    %v1471 = vpop.f32.mrb[0].mxu0
    %1472 = vdwg.mxu0
    %1474 = vrot.lane.b32.xlu0 %v1138, 8
    %v1475 = vpop.permute.xlu0 %1474
    %1478 = vrot.lane.b32.xlu0 %v1304, 16
    %v1479 = vpop.permute.xlu0 %1478
    %1482 = vrot.lane.b32.xlu0 %v1470, 24
    %v1483 = vpop.permute.xlu0 %1482
    %v1485 = vsel %vm132, %v972, %v1475
    %v1486 = vsel %vm806, %v1485, %v1479
    %v1487 = vsel %vm808, %v1486, %v1483
    %v1489 = vlaneseq
    %v1490 = vshrl.u32 %v1489, 7
    %v1491 = vsub.s32 0, %v1490
    %v1492 = vrot.slane %v40, %v1491
    %vm1494 = vcmask 261120
    %v1496 = vsel %vm1494, %v809, 0
    %v1499 = vsel %vm1494, %v1487, 0
    %1501 = vmatprep.subr.mxu0 0.0
    %1502 = vmatpush1.msra.mxu0 %v36
    %1503 = vmatprep.subr.mxu0 0.0
    %1504 = vmatpush1.msra.mxu0 %v37
    %1505 = vmatprep.subr.mxu0 0.0
    %1506 = vmatpush1.msra.mxu0 %v38
    %1507 = vmatprep.subr.mxu0 0.0
    %1508 = vmatpush1.msra.mxu0 %v39
    %1509 = vmatprep.subr.mxu0 0.0
    %1510 = vmatpush1.msra.mxu0 0.0
    %1511 = vmatprep.subr.mxu0 0.0
    %1512 = vmatpush1.msra.mxu0 0.0
    %1513 = vmatprep.subr.mxu0 0.0
    %1514 = vmatpush1.msra.mxu0 0.0
    %1515 = vmatprep.subr.mxu0 0.0
    %1516 = vmatpush1.msra.mxu0 0.0
    %1517 = vmatprep.subr.mxu0 0.0
    %1518 = vmatpush1.msra.mxu0 0.0
    %1519 = vmatprep.subr.mxu0 0.0
    %1520 = vmatpush1.msra.mxu0 0.0
    %1521 = vmatprep.subr.mxu0 0.0
    %1522 = vmatpush1.msra.mxu0 0.0
    %1523 = vmatprep.subr.mxu0 0.0
    %1524 = vmatpush1.msra.mxu0 0.0
    %1525 = vmatprep.subr.mxu0 0.0
    %1526 = vmatpush1.msra.mxu0 0.0
    %1527 = vmatprep.subr.mxu0 0.0
    %1528 = vmatpush1.msra.mxu0 0.0
    %1529 = vmatprep.subr.mxu0 0.0
    %1530 = vmatpush1.msra.mxu0 0.0
    %1531 = vmatprep.subr.mxu0 0.0
    %1532 = vmatpush1.msra.mxu0 0.0
    %1533 = vmatprep.subr.mxu0 0.0
    %1534 = vmatpush1.msra.mxu0 0.0
    %1535 = vmatprep.subr.mxu0 0.0
    %1536 = vmatpush1.msra.mxu0 0.0
    %1537 = vmatprep.subr.mxu0 0.0
    %1538 = vmatpush1.msra.mxu0 0.0
    %1539 = vmatprep.subr.mxu0 0.0
    %1540 = vmatpush1.msra.mxu0 0.0
    %1541 = vmatprep.subr.mxu0 0.0
    %1542 = vmatpush1.msra.mxu0 0.0
    %1543 = vmatprep.subr.mxu0 0.0
    %1544 = vmatpush1.msra.mxu0 0.0
    %1545 = vmatprep.subr.mxu0 0.0
    %1546 = vmatpush1.msra.mxu0 0.0
    %1547 = vmatprep.subr.mxu0 0.0
    %1548 = vmatpush1.msra.mxu0 0.0
    %1549 = vmatprep.subr.mxu0 0.0
    %1550 = vmatpush1.msra.mxu0 0.0
    %1551 = vmatprep.subr.mxu0 0.0
    %1552 = vmatpush1.msra.mxu0 0.0
    %1553 = vmatprep.subr.mxu0 0.0
    %1554 = vmatpush1.msra.mxu0 0.0
    %1555 = vmatprep.subr.mxu0 0.0
    %1556 = vmatpush1.msra.mxu0 0.0
    %1557 = vmatprep.subr.mxu0 0.0
    %1558 = vmatpush1.msra.mxu0 0.0
    %1559 = vmatprep.subr.mxu0 0.0
    %1560 = vmatpush1.msra.mxu0 0.0
    %1561 = vmatprep.subr.mxu0 0.0
    %1562 = vmatpush1.msra.mxu0 0.0
    %1563 = vmatprep.subr.mxu0 0.0
    %1564 = vmatpush1.msra.mxu0 0.0
    %1565 = vmatprep.mubr.f32.mxu0 0.0
    %1566 = vmatmul.mubr.f32.gmra.mrb[0].mxu0 %v1496
    %v1567 = vpop.f32.mrb[0].mxu0
    %v1568 = vadd.f32 %v1492, %v1567
    %v1569 = vpop.f32.mrb[0].mxu0
    %1570 = vmatprep.mubr.f32.mxu0 0.0
    %1571 = vmatmul.mubr.f32.gmra.mrb[0].mxu0 %v1499
    %v1572 = vpop.f32.mrb[0].mxu0
    %v1573 = vadd.f32 %v1492, %v1572
    %v1574 = vpop.f32.mrb[0].mxu0
    %1575 = vdwg.mxu0
    %1576 = vst.msk [vmem:[#allocation2] sm:$0xff] %vm1494, %v1568
    %1577 = vst.msk [vmem:[#allocation2 + $0x8] sm:$0xff] %vm1494, %v1573
    // Predicated region
    $region22: #{attention_fwd.1} parent=1 // pred_check
      _
    $region23: #{attention_fwd.1} parent=1 // pred_check_branch
      %1579 = sbr.rel (0) target = $region25
    $region24: #{attention_fwd.1} parent=1 // pred_region
      %s1581 = ssub.s32 256, 256
      %1582 = vsyncadd [#allocation3], %s1581
      %s1583 = sshll.u32 [#allocation2], 4
      %s1584 = int_to_ptr.vmem [resolvable:$true] %s1583
      %1589 = dma.vmem_to_hbm [thread:$0]  %s1584, 256, %s5, [#allocation3], 128, 128, 8
    $region25: #{attention_fwd.1} parent=1 // pred_fallthru
      _
    // Predicated region
    $region26: #{attention_fwd.1} parent=1 // pred_check
      _
    $region27: #{attention_fwd.1} parent=1 // pred_check_branch
      %1591 = sbr.rel (0) target = $region29
    $region28: #{attention_fwd.1} parent=1 // pred_region
      %1592 = dma.done [#allocation3], 256
    $region29: #{attention_fwd.1} parent=1 // pred_fallthru
      _
    %1593 = vsyncpa [#allocation3], 1

</llo_original>
